<compile_context>
chip_gen: v5e
topology: v5e:2x2
jax: 0.10.0
libtpu: 0.0.40
codegen_flags: <defaults>
</compile_context>

<pallas_src>
import functools

import jax
import jax.numpy as jnp
from jax import lax
from jax.experimental import pallas as pl
from jax.experimental.pallas import tpu as pltpu


def _gru_encoder_kernel(x_ref, mask_ref, wih_ref, brz_ref, whh_ref, bhn_ref, *rest,
                        seq_len, batch_block, hidden_size, use_linear, use_activation):
    """One batch block: whole GRU recurrence + final projection in a single invocation.

    Refs (per batch block of BB rows):
      x_ref    : (S*BB, I)   time-major, flattened inputs for this block
      mask_ref : (S, BB, H)  f32 validity mask (1.0 while t < seq_lengths[b])
      wih_ref  : (I, 3H)     input->gates weights, columns [r | z | n]
      brz_ref  : (1, 3H)     fused biases [b_ir+b_hr | b_iz+b_hz | b_in]
      whh_ref  : (H, 3H)     hidden->gates weights, columns [r | z | n]
      bhn_ref  : (1, H)      b_hn (must stay inside the r-multiply)
      [wenc_ref: (H, E), benc_ref: (1, E)]   only if use_linear
      hid_ref  : (BB, E)     output
      gi_ref   : (S*BB, 3H)  VMEM scratch holding the precomputed input projection
    """
    S, BB, H = seq_len, batch_block, hidden_size
    if use_linear:
        wenc_ref, benc_ref, hid_ref, gi_ref = rest
    else:
        hid_ref, gi_ref = rest

    # ---- prologue: x-side of all gates as ONE well-shaped MXU call, off the
    #      recurrence critical path (x_t does not depend on h). ----
    gi_ref[...] = (jnp.dot(x_ref[...], wih_ref[...],
                           preferred_element_type=jnp.float32) + brz_ref[...])

    # Small loop-invariant operands hoisted once. (Drop the whh hoist if spills show
    # up at larger H — VMEM sustains 3 vector loads/cycle so reloading is cheap.)
    whh = whh_ref[...]                                     # (H, 3H)
    bhn = jnp.broadcast_to(bhn_ref[...], (BB, H))          # hoisted: JAX won't CSE broadcasts

    def step(t, h):
        row = pl.multiple_of(t * BB, 8)                    # sublane-aligned slice start
        gi = gi_ref[pl.ds(row, BB), :]                     # (BB, 3H), precomputed
        gh = jnp.dot(h, whh, preferred_element_type=jnp.float32)  # only matmul on serial path
        rz = jax.nn.sigmoid(gi[:, :2 * H] + gh[:, :2 * H])        # one EUP pass for r|z
        r = rz[:, :H]
        z = rz[:, H:]
        n = jnp.tanh(gi[:, 2 * H:] + r * (gh[:, 2 * H:] + bhn))
        h_new = n + z * (h - n)                            # == (1-z)*n + z*h
        m = mask_ref[t]                                    # (BB, H), pre-broadcast in wrapper
        return jnp.where(m != 0.0, h_new, h)               # freeze past each row's length

    h0 = jnp.zeros((BB, H), jnp.float32)
    unroll = True if S <= 16 else 8                        # bound code size / vreg live ranges
    h = lax.fori_loop(0, S, step, h0, unroll=unroll)

    # ---- epilogue: linear_enc (+ sigmoid) once, off the recurrence path. ----
    if use_linear:
        out = jnp.dot(h, wenc_ref[...], preferred_element_type=jnp.float32) + benc_ref[...]
    else:
        out = h                                            # no pointless identity matmul
    if use_activation:
        out = jax.nn.sigmoid(out)
    hid_ref[...] = out.astype(hid_ref.dtype)


def encoder_forward_pallas(padded, seq_lengths, params, *, use_linear=True, use_activation=True):
    """padded: (B, S, I) batch_first input; seq_lengths: (B,) ints.

    Returns (padded, hidden) where hidden has shape (1, B, 3) if use_linear else (1, B, H),
    mirroring `return (packed, hidden_state)` of the PyTorch module (padded stands in for
    the PackedSequence).
    """
    B, S, I = padded.shape
    H = params["w_hh"].shape[1]
    E = params["w_enc"].shape[0] if use_linear else H

    # ---- one-off weight/bias packing in the wrapper (hoisted off the kernel) ----
    wih_t = params["w_ih"].T.astype(jnp.float32)           # (I, 3H), PyTorch gate order r,z,n
    whh_t = params["w_hh"].T.astype(jnp.float32)           # (H, 3H)
    b_ih = params["b_ih"].astype(jnp.float32)
    b_hh = params["b_hh"].astype(jnp.float32)
    brz_n = jnp.concatenate([b_ih[:2 * H] + b_hh[:2 * H],  # r,z biases fully fused into gi
                             b_ih[2 * H:]]).reshape(1, 3 * H)
    bhn = b_hh[2 * H:].reshape(1, H)                       # b_hn stays inside r * (.)

    # ---- pad batch to a sublane multiple; optional 2-way split for v7x megacore ----
    Bp = ((B + 7) // 8) * 8
    if Bp != B:
        padded_p = jnp.zeros((Bp, S, I), padded.dtype).at[:B].set(padded)
        seq_p = jnp.zeros((Bp,), jnp.int32).at[:B].set(seq_lengths.astype(jnp.int32))
    else:
        padded_p = padded
        seq_p = seq_lengths.astype(jnp.int32)
    nb = 2 if Bp % 16 == 0 else 1                          # independent batch halves
    BB = Bp // nb

    # time-major, per-batch-block flattened input: (nb, S*BB, I)
    x_seq = jnp.transpose(padded_p, (1, 0, 2)).astype(jnp.float32)            # (S, Bp, I)
    x_blk = x_seq.reshape(S, nb, BB, I).transpose(1, 0, 2, 3).reshape(nb, S * BB, I)

    # validity mask pre-broadcast to (nb, S, BB, H) — no per-step broadcast in-kernel
    valid = (jnp.arange(S, dtype=jnp.int32)[:, None] < seq_p[None, :]).astype(jnp.float32)
    mask_blk = jnp.broadcast_to(valid[:, :, None], (S, Bp, H))
    mask_blk = mask_blk.reshape(S, nb, BB, H).transpose(1, 0, 2, 3)

    inputs = [x_blk, mask_blk, wih_t, brz_n, whh_t, bhn]
    in_specs = [
        pl.BlockSpec((None, S * BB, I), lambda b: (b, 0, 0)),     # this block's sequence slab
        pl.BlockSpec((None, S, BB, H), lambda b: (b, 0, 0, 0)),   # this block's mask
        pl.BlockSpec((I, 3 * H), lambda b: (0, 0)),               # W_ih (gates r|z|n)
        pl.BlockSpec((1, 3 * H), lambda b: (0, 0)),               # fused r/z/n biases
        pl.BlockSpec((H, 3 * H), lambda b: (0, 0)),               # W_hh (gates r|z|n)
        pl.BlockSpec((1, H), lambda b: (0, 0)),                   # b_hn
    ]
    if use_linear:
        wenc = params["w_enc"].T.astype(jnp.float32)              # (H, 3)
        benc = params["b_enc"].astype(jnp.float32).reshape(1, -1)
        inputs += [wenc, benc]
        in_specs += [pl.BlockSpec((H, E), lambda b: (0, 0)),
                     pl.BlockSpec((1, E), lambda b: (0, 0))]

    kernel = functools.partial(_gru_encoder_kernel, seq_len=S, batch_block=BB,
                               hidden_size=H, use_linear=use_linear,
                               use_activation=use_activation)

    hidden = pl.pallas_call(
        kernel,
        out_shape=jax.ShapeDtypeStruct((Bp, E), jnp.float32),
        grid_spec=pltpu.PrefetchScalarGridSpec(
            num_scalar_prefetch=0,
            grid=(nb,),                                           # independent batch blocks
            in_specs=in_specs,
            out_specs=pl.BlockSpec((BB, E), lambda b: (b, 0)),
            scratch_shapes=[pltpu.VMEM((S * BB, 3 * H), jnp.float32)],  # precomputed gi
        ),
        compiler_params=pltpu.CompilerParams(
            dimension_semantics=("parallel",),                    # engages v7x's 2nd TC
            vmem_limit_bytes=32 * 1024 * 1024,                    # within v7x 64 MiB physical
        ),
    )(*inputs)

    hidden = hidden[:B]
    return padded, hidden[None]                                   # (1, B, E) like nn.GRU h_n


def encoder_forward_reference(padded, seq_lengths, params, *, use_linear=True, use_activation=True):
    """Pure-JAX reference mirroring the PyTorch Encoder step by step."""
    B, S, I = padded.shape
    H = params["w_hh"].shape[1]
    w_ih, w_hh = params["w_ih"], params["w_hh"]
    b_ih, b_hh = params["b_ih"], params["b_hh"]
    h = jnp.zeros((B, H), jnp.float32)
    for t in range(S):
        x = padded[:, t, :]
        gi = x @ w_ih.T + b_ih
        gh = h @ w_hh.T + b_hh
        r = jax.nn.sigmoid(gi[:, :H] + gh[:, :H])
        z = jax.nn.sigmoid(gi[:, H:2 * H] + gh[:, H:2 * H])
        n = jnp.tanh(gi[:, 2 * H:] + r * gh[:, 2 * H:])
        h_new = (1.0 - z) * n + z * h
        m = (t < seq_lengths).astype(jnp.float32)[:, None]
        h = m * h_new + (1.0 - m) * h
    if use_linear:
        h = h @ params["w_enc"].T + params["b_enc"]
    if use_activation:
        h = jax.nn.sigmoid(h)
    return h[None]


def make_params(key, input_size, hidden_size, enc_out=3):
    """Deterministic synthetic parameters in PyTorch shapes."""
    ks = jax.random.split(key, 6)
    I, H = input_size, hidden_size
    s = 0.1
    return {
        "w_ih": jax.random.normal(ks[0], (3 * H, I), jnp.float32) * s,     # nn.GRU weight_ih_l0
        "w_hh": jax.random.normal(ks[1], (3 * H, H), jnp.float32) * s,     # nn.GRU weight_hh_l0
        "b_ih": jax.random.normal(ks[2], (3 * H,), jnp.float32) * s,
        "b_hh": jax.random.normal(ks[3], (3 * H,), jnp.float32) * s,
        "w_enc": jax.random.normal(ks[4], (enc_out, H), jnp.float32) * s,  # nn.Linear(H, 3)
        "b_enc": jax.random.normal(ks[5], (enc_out,), jnp.float32) * s,
    }


if __name__ == "__main__":
    key = jax.random.PRNGKey(0)
    k_x, k_p, k_x2 = jax.random.split(key, 3)

    # ---- primary case: B=8, S=10, I=8, H=32 ----
    B, S, I, H = 8, 10, 8, 32
    padded = jax.random.normal(k_x, (B, S, I), jnp.float32)
    seq_lengths = jnp.array([10, 7, 9, 4, 10, 6, 3, 8], jnp.int32)
    valid = (jnp.arange(S)[None, :, None] < seq_lengths[:, None, None]).astype(jnp.float32)
    padded = padded * valid                                 # zero the padding positions
    params = make_params(k_p, I, H)

    _, hidden = encoder_forward_pallas(padded, seq_lengths, params,
                                       use_linear=True, use_activation=True)
    hidden = jax.block_until_ready(hidden)
    ref = encoder_forward_reference(padded, seq_lengths, params,
                                    use_linear=True, use_activation=True)
    assert hidden.shape == (1, B, 3), hidden.shape
    assert jnp.allclose(hidden, ref, atol=5e-5, rtol=5e-5), "mismatch vs pure-JAX reference"

    # ---- second case exercising the 2-way batch-parallel grid (B=16) ----
    B2 = 16
    padded2 = jax.random.normal(k_x2, (B2, S, I), jnp.float32)
    seq_lengths2 = jnp.array([10, 7, 9, 4, 10, 6, 3, 8, 5, 10, 2, 9, 1, 10, 7, 6], jnp.int32)
    valid2 = (jnp.arange(S)[None, :, None] < seq_lengths2[:, None, None]).astype(jnp.float32)
    padded2 = padded2 * valid2
    _, hidden2 = encoder_forward_pallas(padded2, seq_lengths2, params,
                                        use_linear=True, use_activation=True)
    hidden2 = jax.block_until_ready(hidden2)
    ref2 = encoder_forward_reference(padded2, seq_lengths2, params,
                                     use_linear=True, use_activation=True)
    assert hidden2.shape == (1, B2, 3), hidden2.shape
    assert jnp.allclose(hidden2, ref2, atol=5e-5, rtol=5e-5), "mismatch (batch-split path)"

    print("KERNEL_OK")
</pallas_src>

<mosaic_0001>
module attributes {stable_mosaic.version = 11 : i64} {
  func.func @_gru_encoder_kernel(%arg0: i32, %arg1: memref<1x80x8xf32, #tpu.memory_space<vmem>>, %arg2: memref<1x10x8x32xf32, #tpu.memory_space<vmem>>, %arg3: memref<8x96xf32, #tpu.memory_space<vmem>>, %arg4: memref<1x96xf32, #tpu.memory_space<vmem>>, %arg5: memref<32x96xf32, #tpu.memory_space<vmem>>, %arg6: memref<1x32xf32, #tpu.memory_space<vmem>>, %arg7: memref<32x3xf32, #tpu.memory_space<vmem>>, %arg8: memref<1x3xf32, #tpu.memory_space<vmem>>, %arg9: memref<8x3xf32, #tpu.memory_space<vmem>>, %arg10: memref<80x96xf32, #tpu.memory_space<vmem>>) attributes {dimension_semantics = [#tpu.dimension_semantics<parallel>], iteration_bounds = array<i64: 1>, scalar_prefetch = 0 : i64, scratch_operands = 1 : i64, tpu.core_type = #tpu.core_type<tc>, window_params = [{transform_indices = @transform_0, window_bounds = array<i64: 1, 80, 8>}, {transform_indices = @transform_1, window_bounds = array<i64: 1, 10, 8, 32>}, {pipeline_mode = #tpu.pipeline_mode<synchronous>, transform_indices = @transform_2, window_bounds = array<i64: 8, 96>}, {pipeline_mode = #tpu.pipeline_mode<synchronous>, transform_indices = @transform_3, window_bounds = array<i64: 1, 96>}, {pipeline_mode = #tpu.pipeline_mode<synchronous>, transform_indices = @transform_4, window_bounds = array<i64: 32, 96>}, {pipeline_mode = #tpu.pipeline_mode<synchronous>, transform_indices = @transform_5, window_bounds = array<i64: 1, 32>}, {pipeline_mode = #tpu.pipeline_mode<synchronous>, transform_indices = @transform_6, window_bounds = array<i64: 32, 3>}, {pipeline_mode = #tpu.pipeline_mode<synchronous>, transform_indices = @transform_7, window_bounds = array<i64: 1, 3>}, {transform_indices = @transform_8, window_bounds = array<i64: 8, 3>}]} {
    %c0 = arith.constant 0 : index
    %c0_0 = arith.constant 0 : index
    %c0_1 = arith.constant 0 : index
    %0 = vector.load %arg1[%c0, %c0_0, %c0_1] : memref<1x80x8xf32, #tpu.memory_space<vmem>>, vector<1x80x8xf32>
    %1 = vector.shape_cast %0 : vector<1x80x8xf32> to vector<80x8xf32>
    %c0_2 = arith.constant 0 : index
    %c0_3 = arith.constant 0 : index
    %2 = vector.load %arg3[%c0_2, %c0_3] : memref<8x96xf32, #tpu.memory_space<vmem>>, vector<8x96xf32>
    %cst = arith.constant dense<0.000000e+00> : vector<80x96xf32>
    %3 = tpu.matmul %1, %2, %cst {dimension_numbers = #tpu.dot_dimension_numbers<[1], [0], [0], [1], [0, 0, 1, 1], [], []>} : vector<80x8xf32>, vector<8x96xf32>, vector<80x96xf32> -> vector<80x96xf32>
    %c0_4 = arith.constant 0 : index
    %c0_5 = arith.constant 0 : index
    %4 = vector.load %arg4[%c0_4, %c0_5] : memref<1x96xf32, #tpu.memory_space<vmem>>, vector<1x96xf32>
    %5 = vector.broadcast %4 : vector<1x96xf32> to vector<80x96xf32>
    %6 = arith.addf %3, %5 : vector<80x96xf32>
    %c0_6 = arith.constant 0 : index
    %c0_7 = arith.constant 0 : index
    %7 = vector.load %arg10[%c0_6, %c0_7] : memref<80x96xf32, #tpu.memory_space<vmem>>, vector<80x96xf32>
    tpu.vector_store %arg10[%c0_6, %c0_7], %6 {strides = array<i32>} : memref<80x96xf32, #tpu.memory_space<vmem>>, vector<80x96xf32>,
    %c0_8 = arith.constant 0 : index
    %c0_9 = arith.constant 0 : index
    %8 = vector.load %arg5[%c0_8, %c0_9] : memref<32x96xf32, #tpu.memory_space<vmem>>, vector<32x96xf32>
    %c0_10 = arith.constant 0 : index
    %c0_11 = arith.constant 0 : index
    %9 = vector.load %arg6[%c0_10, %c0_11] : memref<1x32xf32, #tpu.memory_space<vmem>>, vector<1x32xf32>
    %10 = vector.shape_cast %9 : vector<1x32xf32> to vector<1x32xf32>
    %11 = vector.broadcast %10 : vector<1x32xf32> to vector<8x32xf32>
    %cst_12 = arith.constant 0.000000e+00 : f32
    %12 = vector.broadcast %cst_12 : f32 to vector<8x32xf32>
    %c0_i32 = arith.constant 0 : i32
    %c8_i32 = arith.constant 8 : i32
    %13 = arith.muli %c0_i32, %c8_i32 : i32
    %14 = tpu.assume_multiple %13, 8 : i32
    %15 = arith.index_cast %14 : i32 to index
    %c0_13 = arith.constant 0 : index
    %16 = vector.load %arg10[%15, %c0_13] : memref<80x96xf32, #tpu.memory_space<vmem>>, vector<8x96xf32>
    %cst_14 = arith.constant dense<0.000000e+00> : vector<8x96xf32>
    %17 = tpu.matmul %12, %8, %cst_14 {dimension_numbers = #tpu.dot_dimension_numbers<[1], [0], [0], [1], [0, 0, 1, 1], [], []>} : vector<8x32xf32>, vector<32x96xf32>, vector<8x96xf32> -> vector<8x96xf32>
    %18 = vector.extract_strided_slice %16 {offsets = [0, 0], sizes = [8, 64], strides = [1, 1]} : vector<8x96xf32> to vector<8x64xf32>
    %19 = vector.extract_strided_slice %17 {offsets = [0, 0], sizes = [8, 64], strides = [1, 1]} : vector<8x96xf32> to vector<8x64xf32>
    %20 = arith.addf %18, %19 : vector<8x64xf32>
    %21 = arith.negf %20 : vector<8x64xf32>
    %22 = math.exp %21 : vector<8x64xf32>
    %cst_15 = arith.constant 1.000000e+00 : f32
    %23 = vector.broadcast %cst_15 : f32 to vector<8x64xf32>
    %24 = arith.addf %23, %22 : vector<8x64xf32>
    %25 = arith.divf %23, %24 : vector<8x64xf32>
    %26 = vector.extract_strided_slice %25 {offsets = [0, 0], sizes = [8, 32], strides = [1, 1]} : vector<8x64xf32> to vector<8x32xf32>
    %27 = vector.extract_strided_slice %25 {offsets = [0, 32], sizes = [8, 32], strides = [1, 1]} : vector<8x64xf32> to vector<8x32xf32>
    %28 = vector.extract_strided_slice %16 {offsets = [0, 64], sizes = [8, 32], strides = [1, 1]} : vector<8x96xf32> to vector<8x32xf32>
    %29 = vector.extract_strided_slice %17 {offsets = [0, 64], sizes = [8, 32], strides = [1, 1]} : vector<8x96xf32> to vector<8x32xf32>
    %30 = arith.addf %29, %11 : vector<8x32xf32>
    %31 = arith.mulf %26, %30 : vector<8x32xf32>
    %32 = arith.addf %28, %31 : vector<8x32xf32>
    %33 = math.tanh %32 : vector<8x32xf32>
    %34 = arith.subf %12, %33 : vector<8x32xf32>
    %35 = arith.mulf %27, %34 : vector<8x32xf32>
    %36 = arith.addf %33, %35 : vector<8x32xf32>
    %c0_16 = arith.constant 0 : index
    %37 = arith.index_cast %c0_i32 : i32 to index
    %c0_17 = arith.constant 0 : index
    %c0_18 = arith.constant 0 : index
    %38 = vector.load %arg2[%c0_16, %37, %c0_17, %c0_18] : memref<1x10x8x32xf32, #tpu.memory_space<vmem>>, vector<1x1x8x32xf32>
    %39 = vector.shape_cast %38 : vector<1x1x8x32xf32> to vector<8x32xf32>
    %cst_19 = arith.constant 0.000000e+00 : f32
    %40 = vector.broadcast %cst_19 : f32 to vector<8x32xf32>
    %41 = arith.cmpf one, %39, %40 : vector<8x32xf32>
    %42 = arith.select %41, %36, %12 : vector<8x32xi1>, vector<8x32xf32>
    %c1_i32 = arith.constant 1 : i32
    %c8_i32_20 = arith.constant 8 : i32
    %43 = arith.muli %c1_i32, %c8_i32_20 : i32
    %44 = tpu.assume_multiple %43, 8 : i32
    %45 = arith.index_cast %44 : i32 to index
    %c0_21 = arith.constant 0 : index
    %46 = vector.load %arg10[%45, %c0_21] : memref<80x96xf32, #tpu.memory_space<vmem>>, vector<8x96xf32>
    %cst_22 = arith.constant dense<0.000000e+00> : vector<8x96xf32>
    %47 = tpu.matmul %42, %8, %cst_22 {dimension_numbers = #tpu.dot_dimension_numbers<[1], [0], [0], [1], [0, 0, 1, 1], [], []>} : vector<8x32xf32>, vector<32x96xf32>, vector<8x96xf32> -> vector<8x96xf32>
    %48 = vector.extract_strided_slice %46 {offsets = [0, 0], sizes = [8, 64], strides = [1, 1]} : vector<8x96xf32> to vector<8x64xf32>
    %49 = vector.extract_strided_slice %47 {offsets = [0, 0], sizes = [8, 64], strides = [1, 1]} : vector<8x96xf32> to vector<8x64xf32>
    %50 = arith.addf %48, %49 : vector<8x64xf32>
    %51 = arith.negf %50 : vector<8x64xf32>
    %52 = math.exp %51 : vector<8x64xf32>
    %cst_23 = arith.constant 1.000000e+00 : f32
    %53 = vector.broadcast %cst_23 : f32 to vector<8x64xf32>
    %54 = arith.addf %53, %52 : vector<8x64xf32>
    %55 = arith.divf %53, %54 : vector<8x64xf32>
    %56 = vector.extract_strided_slice %55 {offsets = [0, 0], sizes = [8, 32], strides = [1, 1]} : vector<8x64xf32> to vector<8x32xf32>
    %57 = vector.extract_strided_slice %55 {offsets = [0, 32], sizes = [8, 32], strides = [1, 1]} : vector<8x64xf32> to vector<8x32xf32>
    %58 = vector.extract_strided_slice %46 {offsets = [0, 64], sizes = [8, 32], strides = [1, 1]} : vector<8x96xf32> to vector<8x32xf32>
    %59 = vector.extract_strided_slice %47 {offsets = [0, 64], sizes = [8, 32], strides = [1, 1]} : vector<8x96xf32> to vector<8x32xf32>
    %60 = arith.addf %59, %11 : vector<8x32xf32>
    %61 = arith.mulf %56, %60 : vector<8x32xf32>
    %62 = arith.addf %58, %61 : vector<8x32xf32>
    %63 = math.tanh %62 : vector<8x32xf32>
    %64 = arith.subf %42, %63 : vector<8x32xf32>
    %65 = arith.mulf %57, %64 : vector<8x32xf32>
    %66 = arith.addf %63, %65 : vector<8x32xf32>
    %c0_24 = arith.constant 0 : index
    %67 = arith.index_cast %c1_i32 : i32 to index
    %c0_25 = arith.constant 0 : index
    %c0_26 = arith.constant 0 : index
    %68 = vector.load %arg2[%c0_24, %67, %c0_25, %c0_26] : memref<1x10x8x32xf32, #tpu.memory_space<vmem>>, vector<1x1x8x32xf32>
    %69 = vector.shape_cast %68 : vector<1x1x8x32xf32> to vector<8x32xf32>
    %cst_27 = arith.constant 0.000000e+00 : f32
    %70 = vector.broadcast %cst_27 : f32 to vector<8x32xf32>
    %71 = arith.cmpf one, %69, %70 : vector<8x32xf32>
    %72 = arith.select %71, %66, %42 : vector<8x32xi1>, vector<8x32xf32>
    %c2_i32 = arith.constant 2 : i32
    %c8_i32_28 = arith.constant 8 : i32
    %73 = arith.muli %c2_i32, %c8_i32_28 : i32
    %74 = tpu.assume_multiple %73, 8 : i32
    %75 = arith.index_cast %74 : i32 to index
    %c0_29 = arith.constant 0 : index
    %76 = vector.load %arg10[%75, %c0_29] : memref<80x96xf32, #tpu.memory_space<vmem>>, vector<8x96xf32>
    %cst_30 = arith.constant dense<0.000000e+00> : vector<8x96xf32>
    %77 = tpu.matmul %72, %8, %cst_30 {dimension_numbers = #tpu.dot_dimension_numbers<[1], [0], [0], [1], [0, 0, 1, 1], [], []>} : vector<8x32xf32>, vector<32x96xf32>, vector<8x96xf32> -> vector<8x96xf32>
    %78 = vector.extract_strided_slice %76 {offsets = [0, 0], sizes = [8, 64], strides = [1, 1]} : vector<8x96xf32> to vector<8x64xf32>
    %79 = vector.extract_strided_slice %77 {offsets = [0, 0], sizes = [8, 64], strides = [1, 1]} : vector<8x96xf32> to vector<8x64xf32>
    %80 = arith.addf %78, %79 : vector<8x64xf32>
    %81 = arith.negf %80 : vector<8x64xf32>
    %82 = math.exp %81 : vector<8x64xf32>
    %cst_31 = arith.constant 1.000000e+00 : f32
    %83 = vector.broadcast %cst_31 : f32 to vector<8x64xf32>
    %84 = arith.addf %83, %82 : vector<8x64xf32>
    %85 = arith.divf %83, %84 : vector<8x64xf32>
    %86 = vector.extract_strided_slice %85 {offsets = [0, 0], sizes = [8, 32], strides = [1, 1]} : vector<8x64xf32> to vector<8x32xf32>
    %87 = vector.extract_strided_slice %85 {offsets = [0, 32], sizes = [8, 32], strides = [1, 1]} : vector<8x64xf32> to vector<8x32xf32>
    %88 = vector.extract_strided_slice %76 {offsets = [0, 64], sizes = [8, 32], strides = [1, 1]} : vector<8x96xf32> to vector<8x32xf32>
    %89 = vector.extract_strided_slice %77 {offsets = [0, 64], sizes = [8, 32], strides = [1, 1]} : vector<8x96xf32> to vector<8x32xf32>
    %90 = arith.addf %89, %11 : vector<8x32xf32>
    %91 = arith.mulf %86, %90 : vector<8x32xf32>
    %92 = arith.addf %88, %91 : vector<8x32xf32>
    %93 = math.tanh %92 : vector<8x32xf32>
    %94 = arith.subf %72, %93 : vector<8x32xf32>
    %95 = arith.mulf %87, %94 : vector<8x32xf32>
    %96 = arith.addf %93, %95 : vector<8x32xf32>
    %c0_32 = arith.constant 0 : index
    %97 = arith.index_cast %c2_i32 : i32 to index
    %c0_33 = arith.constant 0 : index
    %c0_34 = arith.constant 0 : index
    %98 = vector.load %arg2[%c0_32, %97, %c0_33, %c0_34] : memref<1x10x8x32xf32, #tpu.memory_space<vmem>>, vector<1x1x8x32xf32>
    %99 = vector.shape_cast %98 : vector<1x1x8x32xf32> to vector<8x32xf32>
    %cst_35 = arith.constant 0.000000e+00 : f32
    %100 = vector.broadcast %cst_35 : f32 to vector<8x32xf32>
    %101 = arith.cmpf one, %99, %100 : vector<8x32xf32>
    %102 = arith.select %101, %96, %72 : vector<8x32xi1>, vector<8x32xf32>
    %c3_i32 = arith.constant 3 : i32
    %c8_i32_36 = arith.constant 8 : i32
    %103 = arith.muli %c3_i32, %c8_i32_36 : i32
    %104 = tpu.assume_multiple %103, 8 : i32
    %105 = arith.index_cast %104 : i32 to index
    %c0_37 = arith.constant 0 : index
    %106 = vector.load %arg10[%105, %c0_37] : memref<80x96xf32, #tpu.memory_space<vmem>>, vector<8x96xf32>
    %cst_38 = arith.constant dense<0.000000e+00> : vector<8x96xf32>
    %107 = tpu.matmul %102, %8, %cst_38 {dimension_numbers = #tpu.dot_dimension_numbers<[1], [0], [0], [1], [0, 0, 1, 1], [], []>} : vector<8x32xf32>, vector<32x96xf32>, vector<8x96xf32> -> vector<8x96xf32>
    %108 = vector.extract_strided_slice %106 {offsets = [0, 0], sizes = [8, 64], strides = [1, 1]} : vector<8x96xf32> to vector<8x64xf32>
    %109 = vector.extract_strided_slice %107 {offsets = [0, 0], sizes = [8, 64], strides = [1, 1]} : vector<8x96xf32> to vector<8x64xf32>
    %110 = arith.addf %108, %109 : vector<8x64xf32>
    %111 = arith.negf %110 : vector<8x64xf32>
    %112 = math.exp %111 : vector<8x64xf32>
    %cst_39 = arith.constant 1.000000e+00 : f32
    %113 = vector.broadcast %cst_39 : f32 to vector<8x64xf32>
    %114 = arith.addf %113, %112 : vector<8x64xf32>
    %115 = arith.divf %113, %114 : vector<8x64xf32>
    %116 = vector.extract_strided_slice %115 {offsets = [0, 0], sizes = [8, 32], strides = [1, 1]} : vector<8x64xf32> to vector<8x32xf32>
    %117 = vector.extract_strided_slice %115 {offsets = [0, 32], sizes = [8, 32], strides = [1, 1]} : vector<8x64xf32> to vector<8x32xf32>
    %118 = vector.extract_strided_slice %106 {offsets = [0, 64], sizes = [8, 32], strides = [1, 1]} : vector<8x96xf32> to vector<8x32xf32>
    %119 = vector.extract_strided_slice %107 {offsets = [0, 64], sizes = [8, 32], strides = [1, 1]} : vector<8x96xf32> to vector<8x32xf32>
    %120 = arith.addf %119, %11 : vector<8x32xf32>
    %121 = arith.mulf %116, %120 : vector<8x32xf32>
    %122 = arith.addf %118, %121 : vector<8x32xf32>
    %123 = math.tanh %122 : vector<8x32xf32>
    %124 = arith.subf %102, %123 : vector<8x32xf32>
    %125 = arith.mulf %117, %124 : vector<8x32xf32>
    %126 = arith.addf %123, %125 : vector<8x32xf32>
    %c0_40 = arith.constant 0 : index
    %127 = arith.index_cast %c3_i32 : i32 to index
    %c0_41 = arith.constant 0 : index
    %c0_42 = arith.constant 0 : index
    %128 = vector.load %arg2[%c0_40, %127, %c0_41, %c0_42] : memref<1x10x8x32xf32, #tpu.memory_space<vmem>>, vector<1x1x8x32xf32>
    %129 = vector.shape_cast %128 : vector<1x1x8x32xf32> to vector<8x32xf32>
    %cst_43 = arith.constant 0.000000e+00 : f32
    %130 = vector.broadcast %cst_43 : f32 to vector<8x32xf32>
    %131 = arith.cmpf one, %129, %130 : vector<8x32xf32>
    %132 = arith.select %131, %126, %102 : vector<8x32xi1>, vector<8x32xf32>
    %c4_i32 = arith.constant 4 : i32
    %c8_i32_44 = arith.constant 8 : i32
    %133 = arith.muli %c4_i32, %c8_i32_44 : i32
    %134 = tpu.assume_multiple %133, 8 : i32
    %135 = arith.index_cast %134 : i32 to index
    %c0_45 = arith.constant 0 : index
    %136 = vector.load %arg10[%135, %c0_45] : memref<80x96xf32, #tpu.memory_space<vmem>>, vector<8x96xf32>
    %cst_46 = arith.constant dense<0.000000e+00> : vector<8x96xf32>
    %137 = tpu.matmul %132, %8, %cst_46 {dimension_numbers = #tpu.dot_dimension_numbers<[1], [0], [0], [1], [0, 0, 1, 1], [], []>} : vector<8x32xf32>, vector<32x96xf32>, vector<8x96xf32> -> vector<8x96xf32>
    %138 = vector.extract_strided_slice %136 {offsets = [0, 0], sizes = [8, 64], strides = [1, 1]} : vector<8x96xf32> to vector<8x64xf32>
    %139 = vector.extract_strided_slice %137 {offsets = [0, 0], sizes = [8, 64], strides = [1, 1]} : vector<8x96xf32> to vector<8x64xf32>
    %140 = arith.addf %138, %139 : vector<8x64xf32>
    %141 = arith.negf %140 : vector<8x64xf32>
    %142 = math.exp %141 : vector<8x64xf32>
    %cst_47 = arith.constant 1.000000e+00 : f32
    %143 = vector.broadcast %cst_47 : f32 to vector<8x64xf32>
    %144 = arith.addf %143, %142 : vector<8x64xf32>
    %145 = arith.divf %143, %144 : vector<8x64xf32>
    %146 = vector.extract_strided_slice %145 {offsets = [0, 0], sizes = [8, 32], strides = [1, 1]} : vector<8x64xf32> to vector<8x32xf32>
    %147 = vector.extract_strided_slice %145 {offsets = [0, 32], sizes = [8, 32], strides = [1, 1]} : vector<8x64xf32> to vector<8x32xf32>
    %148 = vector.extract_strided_slice %136 {offsets = [0, 64], sizes = [8, 32], strides = [1, 1]} : vector<8x96xf32> to vector<8x32xf32>
    %149 = vector.extract_strided_slice %137 {offsets = [0, 64], sizes = [8, 32], strides = [1, 1]} : vector<8x96xf32> to vector<8x32xf32>
    %150 = arith.addf %149, %11 : vector<8x32xf32>
    %151 = arith.mulf %146, %150 : vector<8x32xf32>
    %152 = arith.addf %148, %151 : vector<8x32xf32>
    %153 = math.tanh %152 : vector<8x32xf32>
    %154 = arith.subf %132, %153 : vector<8x32xf32>
    %155 = arith.mulf %147, %154 : vector<8x32xf32>
    %156 = arith.addf %153, %155 : vector<8x32xf32>
    %c0_48 = arith.constant 0 : index
    %157 = arith.index_cast %c4_i32 : i32 to index
    %c0_49 = arith.constant 0 : index
    %c0_50 = arith.constant 0 : index
    %158 = vector.load %arg2[%c0_48, %157, %c0_49, %c0_50] : memref<1x10x8x32xf32, #tpu.memory_space<vmem>>, vector<1x1x8x32xf32>
    %159 = vector.shape_cast %158 : vector<1x1x8x32xf32> to vector<8x32xf32>
    %cst_51 = arith.constant 0.000000e+00 : f32
    %160 = vector.broadcast %cst_51 : f32 to vector<8x32xf32>
    %161 = arith.cmpf one, %159, %160 : vector<8x32xf32>
    %162 = arith.select %161, %156, %132 : vector<8x32xi1>, vector<8x32xf32>
    %c5_i32 = arith.constant 5 : i32
    %c8_i32_52 = arith.constant 8 : i32
    %163 = arith.muli %c5_i32, %c8_i32_52 : i32
    %164 = tpu.assume_multiple %163, 8 : i32
    %165 = arith.index_cast %164 : i32 to index
    %c0_53 = arith.constant 0 : index
    %166 = vector.load %arg10[%165, %c0_53] : memref<80x96xf32, #tpu.memory_space<vmem>>, vector<8x96xf32>
    %cst_54 = arith.constant dense<0.000000e+00> : vector<8x96xf32>
    %167 = tpu.matmul %162, %8, %cst_54 {dimension_numbers = #tpu.dot_dimension_numbers<[1], [0], [0], [1], [0, 0, 1, 1], [], []>} : vector<8x32xf32>, vector<32x96xf32>, vector<8x96xf32> -> vector<8x96xf32>
    %168 = vector.extract_strided_slice %166 {offsets = [0, 0], sizes = [8, 64], strides = [1, 1]} : vector<8x96xf32> to vector<8x64xf32>
    %169 = vector.extract_strided_slice %167 {offsets = [0, 0], sizes = [8, 64], strides = [1, 1]} : vector<8x96xf32> to vector<8x64xf32>
    %170 = arith.addf %168, %169 : vector<8x64xf32>
    %171 = arith.negf %170 : vector<8x64xf32>
    %172 = math.exp %171 : vector<8x64xf32>
    %cst_55 = arith.constant 1.000000e+00 : f32
    %173 = vector.broadcast %cst_55 : f32 to vector<8x64xf32>
    %174 = arith.addf %173, %172 : vector<8x64xf32>
    %175 = arith.divf %173, %174 : vector<8x64xf32>
    %176 = vector.extract_strided_slice %175 {offsets = [0, 0], sizes = [8, 32], strides = [1, 1]} : vector<8x64xf32> to vector<8x32xf32>
    %177 = vector.extract_strided_slice %175 {offsets = [0, 32], sizes = [8, 32], strides = [1, 1]} : vector<8x64xf32> to vector<8x32xf32>
    %178 = vector.extract_strided_slice %166 {offsets = [0, 64], sizes = [8, 32], strides = [1, 1]} : vector<8x96xf32> to vector<8x32xf32>
    %179 = vector.extract_strided_slice %167 {offsets = [0, 64], sizes = [8, 32], strides = [1, 1]} : vector<8x96xf32> to vector<8x32xf32>
    %180 = arith.addf %179, %11 : vector<8x32xf32>
    %181 = arith.mulf %176, %180 : vector<8x32xf32>
    %182 = arith.addf %178, %181 : vector<8x32xf32>
    %183 = math.tanh %182 : vector<8x32xf32>
    %184 = arith.subf %162, %183 : vector<8x32xf32>
    %185 = arith.mulf %177, %184 : vector<8x32xf32>
    %186 = arith.addf %183, %185 : vector<8x32xf32>
    %c0_56 = arith.constant 0 : index
    %187 = arith.index_cast %c5_i32 : i32 to index
    %c0_57 = arith.constant 0 : index
    %c0_58 = arith.constant 0 : index
    %188 = vector.load %arg2[%c0_56, %187, %c0_57, %c0_58] : memref<1x10x8x32xf32, #tpu.memory_space<vmem>>, vector<1x1x8x32xf32>
    %189 = vector.shape_cast %188 : vector<1x1x8x32xf32> to vector<8x32xf32>
    %cst_59 = arith.constant 0.000000e+00 : f32
    %190 = vector.broadcast %cst_59 : f32 to vector<8x32xf32>
    %191 = arith.cmpf one, %189, %190 : vector<8x32xf32>
    %192 = arith.select %191, %186, %162 : vector<8x32xi1>, vector<8x32xf32>
    %c6_i32 = arith.constant 6 : i32
    %c8_i32_60 = arith.constant 8 : i32
    %193 = arith.muli %c6_i32, %c8_i32_60 : i32
    %194 = tpu.assume_multiple %193, 8 : i32
    %195 = arith.index_cast %194 : i32 to index
    %c0_61 = arith.constant 0 : index
    %196 = vector.load %arg10[%195, %c0_61] : memref<80x96xf32, #tpu.memory_space<vmem>>, vector<8x96xf32>
    %cst_62 = arith.constant dense<0.000000e+00> : vector<8x96xf32>
    %197 = tpu.matmul %192, %8, %cst_62 {dimension_numbers = #tpu.dot_dimension_numbers<[1], [0], [0], [1], [0, 0, 1, 1], [], []>} : vector<8x32xf32>, vector<32x96xf32>, vector<8x96xf32> -> vector<8x96xf32>
    %198 = vector.extract_strided_slice %196 {offsets = [0, 0], sizes = [8, 64], strides = [1, 1]} : vector<8x96xf32> to vector<8x64xf32>
    %199 = vector.extract_strided_slice %197 {offsets = [0, 0], sizes = [8, 64], strides = [1, 1]} : vector<8x96xf32> to vector<8x64xf32>
    %200 = arith.addf %198, %199 : vector<8x64xf32>
    %201 = arith.negf %200 : vector<8x64xf32>
    %202 = math.exp %201 : vector<8x64xf32>
    %cst_63 = arith.constant 1.000000e+00 : f32
    %203 = vector.broadcast %cst_63 : f32 to vector<8x64xf32>
    %204 = arith.addf %203, %202 : vector<8x64xf32>
    %205 = arith.divf %203, %204 : vector<8x64xf32>
    %206 = vector.extract_strided_slice %205 {offsets = [0, 0], sizes = [8, 32], strides = [1, 1]} : vector<8x64xf32> to vector<8x32xf32>
    %207 = vector.extract_strided_slice %205 {offsets = [0, 32], sizes = [8, 32], strides = [1, 1]} : vector<8x64xf32> to vector<8x32xf32>
    %208 = vector.extract_strided_slice %196 {offsets = [0, 64], sizes = [8, 32], strides = [1, 1]} : vector<8x96xf32> to vector<8x32xf32>
    %209 = vector.extract_strided_slice %197 {offsets = [0, 64], sizes = [8, 32], strides = [1, 1]} : vector<8x96xf32> to vector<8x32xf32>
    %210 = arith.addf %209, %11 : vector<8x32xf32>
    %211 = arith.mulf %206, %210 : vector<8x32xf32>
    %212 = arith.addf %208, %211 : vector<8x32xf32>
    %213 = math.tanh %212 : vector<8x32xf32>
    %214 = arith.subf %192, %213 : vector<8x32xf32>
    %215 = arith.mulf %207, %214 : vector<8x32xf32>
    %216 = arith.addf %213, %215 : vector<8x32xf32>
    %c0_64 = arith.constant 0 : index
    %217 = arith.index_cast %c6_i32 : i32 to index
    %c0_65 = arith.constant 0 : index
    %c0_66 = arith.constant 0 : index
    %218 = vector.load %arg2[%c0_64, %217, %c0_65, %c0_66] : memref<1x10x8x32xf32, #tpu.memory_space<vmem>>, vector<1x1x8x32xf32>
    %219 = vector.shape_cast %218 : vector<1x1x8x32xf32> to vector<8x32xf32>
    %cst_67 = arith.constant 0.000000e+00 : f32
    %220 = vector.broadcast %cst_67 : f32 to vector<8x32xf32>
    %221 = arith.cmpf one, %219, %220 : vector<8x32xf32>
    %222 = arith.select %221, %216, %192 : vector<8x32xi1>, vector<8x32xf32>
    %c7_i32 = arith.constant 7 : i32
    %c8_i32_68 = arith.constant 8 : i32
    %223 = arith.muli %c7_i32, %c8_i32_68 : i32
    %224 = tpu.assume_multiple %223, 8 : i32
    %225 = arith.index_cast %224 : i32 to index
    %c0_69 = arith.constant 0 : index
    %226 = vector.load %arg10[%225, %c0_69] : memref<80x96xf32, #tpu.memory_space<vmem>>, vector<8x96xf32>
    %cst_70 = arith.constant dense<0.000000e+00> : vector<8x96xf32>
    %227 = tpu.matmul %222, %8, %cst_70 {dimension_numbers = #tpu.dot_dimension_numbers<[1], [0], [0], [1], [0, 0, 1, 1], [], []>} : vector<8x32xf32>, vector<32x96xf32>, vector<8x96xf32> -> vector<8x96xf32>
    %228 = vector.extract_strided_slice %226 {offsets = [0, 0], sizes = [8, 64], strides = [1, 1]} : vector<8x96xf32> to vector<8x64xf32>
    %229 = vector.extract_strided_slice %227 {offsets = [0, 0], sizes = [8, 64], strides = [1, 1]} : vector<8x96xf32> to vector<8x64xf32>
    %230 = arith.addf %228, %229 : vector<8x64xf32>
    %231 = arith.negf %230 : vector<8x64xf32>
    %232 = math.exp %231 : vector<8x64xf32>
    %cst_71 = arith.constant 1.000000e+00 : f32
    %233 = vector.broadcast %cst_71 : f32 to vector<8x64xf32>
    %234 = arith.addf %233, %232 : vector<8x64xf32>
    %235 = arith.divf %233, %234 : vector<8x64xf32>
    %236 = vector.extract_strided_slice %235 {offsets = [0, 0], sizes = [8, 32], strides = [1, 1]} : vector<8x64xf32> to vector<8x32xf32>
    %237 = vector.extract_strided_slice %235 {offsets = [0, 32], sizes = [8, 32], strides = [1, 1]} : vector<8x64xf32> to vector<8x32xf32>
    %238 = vector.extract_strided_slice %226 {offsets = [0, 64], sizes = [8, 32], strides = [1, 1]} : vector<8x96xf32> to vector<8x32xf32>
    %239 = vector.extract_strided_slice %227 {offsets = [0, 64], sizes = [8, 32], strides = [1, 1]} : vector<8x96xf32> to vector<8x32xf32>
    %240 = arith.addf %239, %11 : vector<8x32xf32>
    %241 = arith.mulf %236, %240 : vector<8x32xf32>
    %242 = arith.addf %238, %241 : vector<8x32xf32>
    %243 = math.tanh %242 : vector<8x32xf32>
    %244 = arith.subf %222, %243 : vector<8x32xf32>
    %245 = arith.mulf %237, %244 : vector<8x32xf32>
    %246 = arith.addf %243, %245 : vector<8x32xf32>
    %c0_72 = arith.constant 0 : index
    %247 = arith.index_cast %c7_i32 : i32 to index
    %c0_73 = arith.constant 0 : index
    %c0_74 = arith.constant 0 : index
    %248 = vector.load %arg2[%c0_72, %247, %c0_73, %c0_74] : memref<1x10x8x32xf32, #tpu.memory_space<vmem>>, vector<1x1x8x32xf32>
    %249 = vector.shape_cast %248 : vector<1x1x8x32xf32> to vector<8x32xf32>
    %cst_75 = arith.constant 0.000000e+00 : f32
    %250 = vector.broadcast %cst_75 : f32 to vector<8x32xf32>
    %251 = arith.cmpf one, %249, %250 : vector<8x32xf32>
    %252 = arith.select %251, %246, %222 : vector<8x32xi1>, vector<8x32xf32>
    %c8_i32_76 = arith.constant 8 : i32
    %c8_i32_77 = arith.constant 8 : i32
    %253 = arith.muli %c8_i32_76, %c8_i32_77 : i32
    %254 = tpu.assume_multiple %253, 8 : i32
    %255 = arith.index_cast %254 : i32 to index
    %c0_78 = arith.constant 0 : index
    %256 = vector.load %arg10[%255, %c0_78] : memref<80x96xf32, #tpu.memory_space<vmem>>, vector<8x96xf32>
    %cst_79 = arith.constant dense<0.000000e+00> : vector<8x96xf32>
    %257 = tpu.matmul %252, %8, %cst_79 {dimension_numbers = #tpu.dot_dimension_numbers<[1], [0], [0], [1], [0, 0, 1, 1], [], []>} : vector<8x32xf32>, vector<32x96xf32>, vector<8x96xf32> -> vector<8x96xf32>
    %258 = vector.extract_strided_slice %256 {offsets = [0, 0], sizes = [8, 64], strides = [1, 1]} : vector<8x96xf32> to vector<8x64xf32>
    %259 = vector.extract_strided_slice %257 {offsets = [0, 0], sizes = [8, 64], strides = [1, 1]} : vector<8x96xf32> to vector<8x64xf32>
    %260 = arith.addf %258, %259 : vector<8x64xf32>
    %261 = arith.negf %260 : vector<8x64xf32>
    %262 = math.exp %261 : vector<8x64xf32>
    %cst_80 = arith.constant 1.000000e+00 : f32
    %263 = vector.broadcast %cst_80 : f32 to vector<8x64xf32>
    %264 = arith.addf %263, %262 : vector<8x64xf32>
    %265 = arith.divf %263, %264 : vector<8x64xf32>
    %266 = vector.extract_strided_slice %265 {offsets = [0, 0], sizes = [8, 32], strides = [1, 1]} : vector<8x64xf32> to vector<8x32xf32>
    %267 = vector.extract_strided_slice %265 {offsets = [0, 32], sizes = [8, 32], strides = [1, 1]} : vector<8x64xf32> to vector<8x32xf32>
    %268 = vector.extract_strided_slice %256 {offsets = [0, 64], sizes = [8, 32], strides = [1, 1]} : vector<8x96xf32> to vector<8x32xf32>
    %269 = vector.extract_strided_slice %257 {offsets = [0, 64], sizes = [8, 32], strides = [1, 1]} : vector<8x96xf32> to vector<8x32xf32>
    %270 = arith.addf %269, %11 : vector<8x32xf32>
    %271 = arith.mulf %266, %270 : vector<8x32xf32>
    %272 = arith.addf %268, %271 : vector<8x32xf32>
    %273 = math.tanh %272 : vector<8x32xf32>
    %274 = arith.subf %252, %273 : vector<8x32xf32>
    %275 = arith.mulf %267, %274 : vector<8x32xf32>
    %276 = arith.addf %273, %275 : vector<8x32xf32>
    %c0_81 = arith.constant 0 : index
    %277 = arith.index_cast %c8_i32_76 : i32 to index
    %c0_82 = arith.constant 0 : index
    %c0_83 = arith.constant 0 : index
    %278 = vector.load %arg2[%c0_81, %277, %c0_82, %c0_83] : memref<1x10x8x32xf32, #tpu.memory_space<vmem>>, vector<1x1x8x32xf32>
    %279 = vector.shape_cast %278 : vector<1x1x8x32xf32> to vector<8x32xf32>
    %cst_84 = arith.constant 0.000000e+00 : f32
    %280 = vector.broadcast %cst_84 : f32 to vector<8x32xf32>
    %281 = arith.cmpf one, %279, %280 : vector<8x32xf32>
    %282 = arith.select %281, %276, %252 : vector<8x32xi1>, vector<8x32xf32>
    %c9_i32 = arith.constant 9 : i32
    %c8_i32_85 = arith.constant 8 : i32
    %283 = arith.muli %c9_i32, %c8_i32_85 : i32
    %284 = tpu.assume_multiple %283, 8 : i32
    %285 = arith.index_cast %284 : i32 to index
    %c0_86 = arith.constant 0 : index
    %286 = vector.load %arg10[%285, %c0_86] : memref<80x96xf32, #tpu.memory_space<vmem>>, vector<8x96xf32>
    %cst_87 = arith.constant dense<0.000000e+00> : vector<8x96xf32>
    %287 = tpu.matmul %282, %8, %cst_87 {dimension_numbers = #tpu.dot_dimension_numbers<[1], [0], [0], [1], [0, 0, 1, 1], [], []>} : vector<8x32xf32>, vector<32x96xf32>, vector<8x96xf32> -> vector<8x96xf32>
    %288 = vector.extract_strided_slice %286 {offsets = [0, 0], sizes = [8, 64], strides = [1, 1]} : vector<8x96xf32> to vector<8x64xf32>
    %289 = vector.extract_strided_slice %287 {offsets = [0, 0], sizes = [8, 64], strides = [1, 1]} : vector<8x96xf32> to vector<8x64xf32>
    %290 = arith.addf %288, %289 : vector<8x64xf32>
    %291 = arith.negf %290 : vector<8x64xf32>
    %292 = math.exp %291 : vector<8x64xf32>
    %cst_88 = arith.constant 1.000000e+00 : f32
    %293 = vector.broadcast %cst_88 : f32 to vector<8x64xf32>
    %294 = arith.addf %293, %292 : vector<8x64xf32>
    %295 = arith.divf %293, %294 : vector<8x64xf32>
    %296 = vector.extract_strided_slice %295 {offsets = [0, 0], sizes = [8, 32], strides = [1, 1]} : vector<8x64xf32> to vector<8x32xf32>
    %297 = vector.extract_strided_slice %295 {offsets = [0, 32], sizes = [8, 32], strides = [1, 1]} : vector<8x64xf32> to vector<8x32xf32>
    %298 = vector.extract_strided_slice %286 {offsets = [0, 64], sizes = [8, 32], strides = [1, 1]} : vector<8x96xf32> to vector<8x32xf32>
    %299 = vector.extract_strided_slice %287 {offsets = [0, 64], sizes = [8, 32], strides = [1, 1]} : vector<8x96xf32> to vector<8x32xf32>
    %300 = arith.addf %299, %11 : vector<8x32xf32>
    %301 = arith.mulf %296, %300 : vector<8x32xf32>
    %302 = arith.addf %298, %301 : vector<8x32xf32>
    %303 = math.tanh %302 : vector<8x32xf32>
    %304 = arith.subf %282, %303 : vector<8x32xf32>
    %305 = arith.mulf %297, %304 : vector<8x32xf32>
    %306 = arith.addf %303, %305 : vector<8x32xf32>
    %c0_89 = arith.constant 0 : index
    %307 = arith.index_cast %c9_i32 : i32 to index
    %c0_90 = arith.constant 0 : index
    %c0_91 = arith.constant 0 : index
    %308 = vector.load %arg2[%c0_89, %307, %c0_90, %c0_91] : memref<1x10x8x32xf32, #tpu.memory_space<vmem>>, vector<1x1x8x32xf32>
    %309 = vector.shape_cast %308 : vector<1x1x8x32xf32> to vector<8x32xf32>
    %cst_92 = arith.constant 0.000000e+00 : f32
    %310 = vector.broadcast %cst_92 : f32 to vector<8x32xf32>
    %311 = arith.cmpf one, %309, %310 : vector<8x32xf32>
    %312 = arith.select %311, %306, %282 : vector<8x32xi1>, vector<8x32xf32>
    %c10_i32 = arith.constant 10 : i32
    %c0_93 = arith.constant 0 : index
    %c0_94 = arith.constant 0 : index
    %313 = vector.load %arg7[%c0_93, %c0_94] : memref<32x3xf32, #tpu.memory_space<vmem>>, vector<32x3xf32>
    %cst_95 = arith.constant dense<0.000000e+00> : vector<8x3xf32>
    %314 = tpu.matmul %312, %313, %cst_95 {dimension_numbers = #tpu.dot_dimension_numbers<[1], [0], [0], [1], [0, 0, 1, 1], [], []>} : vector<8x32xf32>, vector<32x3xf32>, vector<8x3xf32> -> vector<8x3xf32>
    %c0_96 = arith.constant 0 : index
    %c0_97 = arith.constant 0 : index
    %315 = vector.load %arg8[%c0_96, %c0_97] : memref<1x3xf32, #tpu.memory_space<vmem>>, vector<1x3xf32>
    %316 = vector.broadcast %315 : vector<1x3xf32> to vector<8x3xf32>
    %317 = arith.addf %314, %316 : vector<8x3xf32>
    %318 = arith.negf %317 : vector<8x3xf32>
    %319 = math.exp %318 : vector<8x3xf32>
    %cst_98 = arith.constant 1.000000e+00 : f32
    %320 = vector.broadcast %cst_98 : f32 to vector<8x3xf32>
    %321 = arith.addf %320, %319 : vector<8x3xf32>
    %322 = arith.divf %320, %321 : vector<8x3xf32>
    %c0_99 = arith.constant 0 : index
    %c0_100 = arith.constant 0 : index
    %323 = vector.load %arg9[%c0_99, %c0_100] : memref<8x3xf32, #tpu.memory_space<vmem>>, vector<8x3xf32>
    tpu.vector_store %arg9[%c0_99, %c0_100], %322 {strides = array<i32>} : memref<8x3xf32, #tpu.memory_space<vmem>>, vector<8x3xf32>,
    return
  }
  func.func @transform_0(%arg0: i32) -> (i32, i32, i32) {
    %c0_i32 = arith.constant 0 : i32
    %c0_i32_0 = arith.constant 0 : i32
    %c0_i32_1 = arith.constant 0 : i32
    return %arg0, %c0_i32, %c0_i32_0 : i32, i32, i32
  }
  func.func @transform_1(%arg0: i32) -> (i32, i32, i32, i32) {
    %c0_i32 = arith.constant 0 : i32
    %c0_i32_0 = arith.constant 0 : i32
    %c0_i32_1 = arith.constant 0 : i32
    %c0_i32_2 = arith.constant 0 : i32
    return %arg0, %c0_i32, %c0_i32_0, %c0_i32_1 : i32, i32, i32, i32
  }
  func.func @transform_2(%arg0: i32) -> (i32, i32) {
    %c0_i32 = arith.constant 0 : i32
    %c0_i32_0 = arith.constant 0 : i32
    %c0_i32_1 = arith.constant 0 : i32
    return %c0_i32, %c0_i32_0 : i32, i32
  }
  func.func @transform_3(%arg0: i32) -> (i32, i32) {
    %c0_i32 = arith.constant 0 : i32
    %c0_i32_0 = arith.constant 0 : i32
    %c0_i32_1 = arith.constant 0 : i32
    return %c0_i32, %c0_i32_0 : i32, i32
  }
  func.func @transform_4(%arg0: i32) -> (i32, i32) {
    %c0_i32 = arith.constant 0 : i32
    %c0_i32_0 = arith.constant 0 : i32
    %c0_i32_1 = arith.constant 0 : i32
    return %c0_i32, %c0_i32_0 : i32, i32
  }
  func.func @transform_5(%arg0: i32) -> (i32, i32) {
    %c0_i32 = arith.constant 0 : i32
    %c0_i32_0 = arith.constant 0 : i32
    %c0_i32_1 = arith.constant 0 : i32
    return %c0_i32, %c0_i32_0 : i32, i32
  }
  func.func @transform_6(%arg0: i32) -> (i32, i32) {
    %c0_i32 = arith.constant 0 : i32
    %c0_i32_0 = arith.constant 0 : i32
    %c0_i32_1 = arith.constant 0 : i32
    return %c0_i32, %c0_i32_0 : i32, i32
  }
  func.func @transform_7(%arg0: i32) -> (i32, i32) {
    %c0_i32 = arith.constant 0 : i32
    %c0_i32_0 = arith.constant 0 : i32
    %c0_i32_1 = arith.constant 0 : i32
    return %c0_i32, %c0_i32_0 : i32, i32
  }
  func.func @transform_8(%arg0: i32) -> (i32, i32) {
    %c0_i32 = arith.constant 0 : i32
    %c0_i32_0 = arith.constant 0 : i32
    return %arg0, %c0_i32 : i32, i32
  }
}

</mosaic_0001>

<llo_original>
// kernel: tpu_custom_call.1
$region0: #{tpu_custom_call.1}
  #allocation0 [shape = 'u32[]', space=smem, size = 0x4, offset = 0x4, fixed_abs, tag = 'smem constant byte address 0x4 - core index']
  #allocation1 [shape = 'u32[72,128]{1,0:T(1,128)}', space=vmem, size = 0x9000, scoped, tag = 'internal scratch']
  #allocation2 [shape = 'f32[80,96]{1,0:T(8,128)}', space=vmem, size = 0xa000, scoped, tag = 'scratch operand']
  %s0 = inlined_call_operand.vmem [shape: f32[1,80,8], index: 0, kind: input, shape index: {}]
  %s1 = inlined_call_operand.vmem [shape: f32[1,10,8,32], index: 1, kind: input, shape index: {}]
  %s2 = inlined_call_operand.hbm [shape: f32[8,96], index: 2, kind: input, shape index: {}]
  %s3 = inlined_call_operand.vmem [shape: f32[1,96], index: 3, kind: input, shape index: {}]
  %s4 = inlined_call_operand.vmem [shape: f32[32,96], index: 4, kind: input, shape index: {}]
  %s5 = inlined_call_operand.vmem [shape: f32[1,32], index: 5, kind: input, shape index: {}]
  %s6 = inlined_call_operand.vmem [shape: f32[32,3], index: 6, kind: input, shape index: {}]
  %s7 = inlined_call_operand.vmem [shape: f32[1,3], index: 7, kind: input, shape index: {}]
  %s8 = inlined_call_operand.vmem [shape: f32[8,3], index: 8, kind: output, shape index: {}]
  %s9 = sld [smem:[#allocation0]]
  $region46: #{tpu_custom_call.1} parent=0
    _
  %s11 = ssub.s32 1, %s9
  %s12 = scalar_select 0, %s11, %s9
  $region1: #{tpu_custom_call.1} parent=0
    #allocation3 [shape = 'u8[4096]{0}', space=vmem, size = 0x1000, scoped, tag = 'input window, operand 2, single buffered']
    #allocation4 [shape = 's32[1]{0}', space=sflag, size = 0x4, scoped, tag = 'scoped memory for tpu_custom_call.1']
    %13 = vsyncpa [#allocation4], 0
    // Predicated region
    $region2: #{tpu_custom_call.1} parent=1 // pred_check
      _
    $region3: #{tpu_custom_call.1} parent=1 // pred_check_branch
      %15 = sbr.rel (0) target = $region5
    $region4: #{tpu_custom_call.1} parent=1 // pred_region
      _
    $region5: #{tpu_custom_call.1} parent=1 // pred_fallthru
      _
    // Predicated region
    $region6: #{tpu_custom_call.1} parent=1 // pred_check
      _
    $region7: #{tpu_custom_call.1} parent=1 // pred_check_branch
      %17 = sbr.rel (0) target = $region9
    $region8: #{tpu_custom_call.1} parent=1 // pred_region
      _
    $region9: #{tpu_custom_call.1} parent=1 // pred_fallthru
      _
    // Predicated region
    $region10: #{tpu_custom_call.1} parent=1 // pred_check
      _
    $region11: #{tpu_custom_call.1} parent=1 // pred_check_branch
      %19 = sbr.rel (0) target = $region13
    $region12: #{tpu_custom_call.1} parent=1 // pred_region
      %21 = vsyncadd [#allocation4], 0
      %s23 = sshll.u32 %s2, 4
      %s24 = int_to_ptr.hbm [resolvable:$true] %s23
      %s25 = sshll.u32 [#allocation3], 4
      %s26 = int_to_ptr.vmem [resolvable:$true] %s25
      %28 = dma.hbm_to_vmem [thread:$0]  %s24, 128, %s26, [#allocation4]
    $region13: #{tpu_custom_call.1} parent=1 // pred_fallthru
      _
    // Predicated region
    $region14: #{tpu_custom_call.1} parent=1 // pred_check
      _
    $region15: #{tpu_custom_call.1} parent=1 // pred_check_branch
      %30 = sbr.rel (0) target = $region17
    $region16: #{tpu_custom_call.1} parent=1 // pred_region
      _
    $region17: #{tpu_custom_call.1} parent=1 // pred_fallthru
      _
    // Predicated region
    $region18: #{tpu_custom_call.1} parent=1 // pred_check
      _
    $region19: #{tpu_custom_call.1} parent=1 // pred_check_branch
      %32 = sbr.rel (0) target = $region21
    $region20: #{tpu_custom_call.1} parent=1 // pred_region
      _
    $region21: #{tpu_custom_call.1} parent=1 // pred_fallthru
      _
    // Predicated region
    $region22: #{tpu_custom_call.1} parent=1 // pred_check
      _
    $region23: #{tpu_custom_call.1} parent=1 // pred_check_branch
      %34 = sbr.rel (0) target = $region25
    $region24: #{tpu_custom_call.1} parent=1 // pred_region
      _
    $region25: #{tpu_custom_call.1} parent=1 // pred_fallthru
      _
    // Predicated region
    $region26: #{tpu_custom_call.1} parent=1 // pred_check
      _
    $region27: #{tpu_custom_call.1} parent=1 // pred_check_branch
      %36 = sbr.rel (0) target = $region29
    $region28: #{tpu_custom_call.1} parent=1 // pred_region
      _
    $region29: #{tpu_custom_call.1} parent=1 // pred_fallthru
      _
    // Predicated region
    $region30: #{tpu_custom_call.1} parent=1 // pred_check
      _
    $region31: #{tpu_custom_call.1} parent=1 // pred_check_branch
      %38 = sbr.rel (0) target = $region33
    $region32: #{tpu_custom_call.1} parent=1 // pred_region
      _
    $region33: #{tpu_custom_call.1} parent=1 // pred_fallthru
      _
    // Predicated region
    $region34: #{tpu_custom_call.1} parent=1 // pred_check
      _
    $region35: #{tpu_custom_call.1} parent=1 // pred_check_branch
      %40 = sbr.rel (0) target = $region37
    $region36: #{tpu_custom_call.1} parent=1 // pred_region
      %42 = dma.done [#allocation4], 128
    $region37: #{tpu_custom_call.1} parent=1 // pred_fallthru
      _
    %v43 = vld [vmem:[%s0] sm:$0xff]
    %v44 = vld [vmem:[%s0 + $0x8] sm:$0xff]
    %v45 = vld [vmem:[%s0 + $0x10] sm:$0xff]
    %v46 = vld [vmem:[%s0 + $0x18] sm:$0xff]
    %v47 = vld [vmem:[%s0 + $0x20] sm:$0xff]
    %v48 = vld [vmem:[%s0 + $0x28] sm:$0xff]
    %v49 = vld [vmem:[%s0 + $0x30] sm:$0xff]
    %v50 = vld [vmem:[%s0 + $0x38] sm:$0xff]
    %v51 = vld [vmem:[%s0 + $0x40] sm:$0xff]
    %v52 = vld [vmem:[%s0 + $0x48] sm:$0xff]
    %v53 = vld [vmem:[#allocation3] sm:$0xff]
    %v54 = vld [vmem:[%s3] sm:$0x1]
    %v56 = vperm.slane %v54, 0
    %vm58 = vcmask 64512
    %v60 = vsel %vm58, %v43, 0
    %v63 = vsel %vm58, %v44, 0
    %v66 = vsel %vm58, %v45, 0
    %v69 = vsel %vm58, %v46, 0
    %v72 = vsel %vm58, %v47, 0
    %v75 = vsel %vm58, %v48, 0
    %v78 = vsel %vm58, %v49, 0
    %v81 = vsel %vm58, %v50, 0
    %v84 = vsel %vm58, %v51, 0
    %v87 = vsel %vm58, %v52, 0
    %89 = vmatpush.msra.mxu0 0.0
    %90 = vmatpush.msra.mxu0 0.0
    %91 = vmatpush.msra.mxu0 0.0
    %92 = vmatpush.msra.mxu0 0.0
    %93 = vmatpush.msra.mxu0 0.0
    %94 = vmatpush.msra.mxu0 0.0
    %95 = vmatpush.msra.mxu0 0.0
    %96 = vmatpush.msra.mxu0 0.0
    %97 = vmatpush.msra.mxu0 0.0
    %98 = vmatpush.msra.mxu0 0.0
    %99 = vmatpush.msra.mxu0 0.0
    %100 = vmatpush.msra.mxu0 0.0
    %101 = vmatpush.msra.mxu0 0.0
    %102 = vmatpush.msra.mxu0 0.0
    %103 = vmatpush.msra.mxu0 0.0
    %104 = vmatpush.msra.mxu0 %v53
    %105 = vmatmul.f32.gmra.mxu0 %v60
    %v106 = vpop.f32.mrf.mxu0
    %v107 = vadd.f32 %v56, %v106
    %108 = vmatmul.f32.gmra.mxu0 %v63
    %v109 = vpop.f32.mrf.mxu0
    %v110 = vadd.f32 %v56, %v109
    %111 = vmatmul.f32.gmra.mxu0 %v66
    %v112 = vpop.f32.mrf.mxu0
    %v113 = vadd.f32 %v56, %v112
    %114 = vmatmul.f32.gmra.mxu0 %v69
    %v115 = vpop.f32.mrf.mxu0
    %v116 = vadd.f32 %v56, %v115
    %117 = vmatmul.f32.gmra.mxu0 %v72
    %v118 = vpop.f32.mrf.mxu0
    %v119 = vadd.f32 %v56, %v118
    %120 = vmatmul.f32.gmra.mxu0 %v75
    %v121 = vpop.f32.mrf.mxu0
    %v122 = vadd.f32 %v56, %v121
    %123 = vmatmul.f32.gmra.mxu0 %v78
    %v124 = vpop.f32.mrf.mxu0
    %v125 = vadd.f32 %v56, %v124
    %126 = vmatmul.f32.gmra.mxu0 %v81
    %v127 = vpop.f32.mrf.mxu0
    %v128 = vadd.f32 %v56, %v127
    %129 = vmatmul.f32.gmra.mxu0 %v84
    %v130 = vpop.f32.mrf.mxu0
    %v131 = vadd.f32 %v56, %v130
    %132 = vmatmul.f32.gmra.mxu0 %v87
    %v133 = vpop.f32.mrf.mxu0
    %v134 = vadd.f32 %v56, %v133
    %135 = vdwg.mxu0
    %vm136 = vcmask 785408
    %137 = vst.msk [vmem:[#allocation2] sm:$0xff] %vm136, %v107
    %138 = vst.msk [vmem:[#allocation2 + $0x8] sm:$0xff] %vm136, %v110
    %139 = vst.msk [vmem:[#allocation2 + $0x10] sm:$0xff] %vm136, %v113
    %140 = vst.msk [vmem:[#allocation2 + $0x18] sm:$0xff] %vm136, %v116
    %141 = vst.msk [vmem:[#allocation2 + $0x20] sm:$0xff] %vm136, %v119
    %142 = vst.msk [vmem:[#allocation2 + $0x28] sm:$0xff] %vm136, %v122
    %143 = vst.msk [vmem:[#allocation2 + $0x30] sm:$0xff] %vm136, %v125
    %144 = vst.msk [vmem:[#allocation2 + $0x38] sm:$0xff] %vm136, %v128
    %145 = vst.msk [vmem:[#allocation2 + $0x40] sm:$0xff] %vm136, %v131
    %146 = vst.msk [vmem:[#allocation2 + $0x48] sm:$0xff] %vm136, %v134
    %v147 = vld [vmem:[%s4] sm:$0xff]
    %v148 = vld [vmem:[%s4 + $0x8] sm:$0xff]
    %v149 = vld [vmem:[%s4 + $0x10] sm:$0xff]
    %v150 = vld [vmem:[%s4 + $0x18] sm:$0xff]
    %v151 = vld [vmem:[%s5] sm:$0x1]
    %v153 = vperm.slane %v151, 0
    %v154 = vld [vmem:[#allocation2] sm:$0xff]
    %vm155 = vcmask 261120
    %v157 = vsel %vm155, 0.0, 0
    %159 = vmatpush.msra.mxu0 0.0
    %160 = vmatpush.msra.mxu0 0.0
    %161 = vmatpush.msra.mxu0 0.0
    %162 = vmatpush.msra.mxu0 0.0
    %163 = vmatpush.msra.mxu0 0.0
    %164 = vmatpush.msra.mxu0 0.0
    %165 = vmatpush.msra.mxu0 0.0
    %166 = vmatpush.msra.mxu0 0.0
    %167 = vmatpush.msra.mxu0 0.0
    %168 = vmatpush.msra.mxu0 0.0
    %169 = vmatpush.msra.mxu0 0.0
    %170 = vmatpush.msra.mxu0 0.0
    %171 = vmatpush.msra.mxu0 %v150
    %172 = vmatpush.msra.mxu0 %v149
    %173 = vmatpush.msra.mxu0 %v148
    %174 = vmatpush.msra.mxu0 %v147
    %175 = vmatmul.f32.gmra.mxu0 %v157
    %v176 = vpop.f32.mrf.mxu0
    %v177 = vadd.f32 0.0, %v176
    %178 = vdwg.mxu0
    %v179 = vadd.f32 %v154, %v177
    %v180 = vxor.u32 %v179, 2147483648
    %v181 = vmul.f32 %v180, 1.442695
    %v182 = vpow.pop %v181
    %v183 = vadd.f32 %v182, 1.0
    %v184 = vrcp.pop %v183
    %v185 = vmul.f32 %v183, %v184
    %v186 = vsub.f32 1.0, %v185
    %v187 = vmul.f32 %v184, %v186
    %v188 = vadd.f32 %v184, %v187
    %vm189 = vweird.f32 %v183
    %vm190 = vweird.f32 %v184
    %vm191 = vmor %vm189, %vm190
    %v192 = vsel %vm191, %v184, %v188
    %v193 = vand.u32 2147483647, %v183
    %vm194 = vcmp.eq.f32.partialorder %v193, 8.507059e+37
    %v195 = vand.u32 %v183, 2147483648
    %v196 = vor.u32 1.1754944e-38, %v195
    %v197 = vsel %vm194, %v196, %v192
    %v198 = vmul.f32 1.0, %v197
    %199 = vrot.lane.b32.xlu0 %v153, 64
    %v200 = vpop.permute.xlu0 %199
    %v202 = vadd.f32 %v177, %v200
    %204 = vrot.lane.b32.xlu0 %v202, 64
    %v205 = vpop.permute.xlu0 %204
    %v207 = vmul.f32 %v198, %v205
    %209 = vrot.lane.b32.xlu0 %v207, 64
    %v210 = vpop.permute.xlu0 %209
    %v212 = vadd.f32 %v154, %v210
    %v213 = vtanh.pop %v212
    %v214 = vsub.f32 0.0, %v213
    %216 = vrot.lane.b32.xlu0 %v214, 96
    %v217 = vpop.permute.xlu0 %216
    %v219 = vmul.f32 %v198, %v217
    %221 = vrot.lane.b32.xlu0 %v219, 32
    %v222 = vpop.permute.xlu0 %221
    %v224 = vadd.f32 %v213, %v222
    %v225 = vld [vmem:[%s1] sm:$0xff]
    %vm226 = vcmp.ne.f32.partialorder %v225, 0.0
    %228 = vrot.lane.b32.xlu0 %v224, 64
    %v229 = vpop.permute.xlu0 %228
    %v231 = vsel %vm226, %v229, 0.0
    %s232 = scalar_lea.vmem [#allocation2], 8
    %v233 = vld [vmem:[%s232] sm:$0xff]
    %v235 = vsel %vm155, %v231, 0
    %237 = vmatpush.msra.mxu0 0.0
    %238 = vmatpush.msra.mxu0 0.0
    %239 = vmatpush.msra.mxu0 0.0
    %240 = vmatpush.msra.mxu0 0.0
    %241 = vmatpush.msra.mxu0 0.0
    %242 = vmatpush.msra.mxu0 0.0
    %243 = vmatpush.msra.mxu0 0.0
    %244 = vmatpush.msra.mxu0 0.0
    %245 = vmatpush.msra.mxu0 0.0
    %246 = vmatpush.msra.mxu0 0.0
    %247 = vmatpush.msra.mxu0 0.0
    %248 = vmatpush.msra.mxu0 0.0
    %249 = vmatpush.msra.mxu0 %v150
    %250 = vmatpush.msra.mxu0 %v149
    %251 = vmatpush.msra.mxu0 %v148
    %252 = vmatpush.msra.mxu0 %v147
    %253 = vmatmul.f32.gmra.mxu0 %v235
    %v254 = vpop.f32.mrf.mxu0
    %v255 = vadd.f32 0.0, %v254
    %256 = vdwg.mxu0
    %v257 = vadd.f32 %v233, %v255
    %v258 = vxor.u32 %v257, 2147483648
    %v259 = vmul.f32 %v258, 1.442695
    %v260 = vpow.pop %v259
    %v261 = vadd.f32 %v260, 1.0
    %v262 = vrcp.pop %v261
    %v263 = vmul.f32 %v261, %v262
    %v264 = vsub.f32 1.0, %v263
    %v265 = vmul.f32 %v262, %v264
    %v266 = vadd.f32 %v262, %v265
    %vm267 = vweird.f32 %v261
    %vm268 = vweird.f32 %v262
    %vm269 = vmor %vm267, %vm268
    %v270 = vsel %vm269, %v262, %v266
    %v271 = vand.u32 2147483647, %v261
    %vm272 = vcmp.eq.f32.partialorder %v271, 8.507059e+37
    %v273 = vand.u32 %v261, 2147483648
    %v274 = vor.u32 1.1754944e-38, %v273
    %v275 = vsel %vm272, %v274, %v270
    %v276 = vmul.f32 1.0, %v275
    %v277 = vadd.f32 %v255, %v200
    %279 = vrot.lane.b32.xlu0 %v277, 64
    %v280 = vpop.permute.xlu0 %279
    %v282 = vmul.f32 %v276, %v280
    %284 = vrot.lane.b32.xlu0 %v282, 64
    %v285 = vpop.permute.xlu0 %284
    %v287 = vadd.f32 %v233, %v285
    %v288 = vtanh.pop %v287
    %290 = vrot.lane.b32.xlu0 %v288, 64
    %v291 = vpop.permute.xlu0 %290
    %v293 = vsub.f32 %v231, %v291
    %295 = vrot.lane.b32.xlu0 %v293, 32
    %v296 = vpop.permute.xlu0 %295
    %v298 = vmul.f32 %v276, %v296
    %300 = vrot.lane.b32.xlu0 %v298, 32
    %v301 = vpop.permute.xlu0 %300
    %v303 = vadd.f32 %v288, %v301
    %s304 = scalar_lea.vmem %s1, 8
    %v305 = vld [vmem:[%s304] sm:$0xff]
    %vm306 = vcmp.ne.f32.partialorder %v305, 0.0
    %308 = vrot.lane.b32.xlu0 %v303, 64
    %v309 = vpop.permute.xlu0 %308
    %v311 = vsel %vm306, %v309, %v231
    %s312 = scalar_lea.vmem [#allocation2], 16
    %v313 = vld [vmem:[%s312] sm:$0xff]
    %v315 = vsel %vm155, %v311, 0
    %317 = vmatpush.msra.mxu0 0.0
    %318 = vmatpush.msra.mxu0 0.0
    %319 = vmatpush.msra.mxu0 0.0
    %320 = vmatpush.msra.mxu0 0.0
    %321 = vmatpush.msra.mxu0 0.0
    %322 = vmatpush.msra.mxu0 0.0
    %323 = vmatpush.msra.mxu0 0.0
    %324 = vmatpush.msra.mxu0 0.0
    %325 = vmatpush.msra.mxu0 0.0
    %326 = vmatpush.msra.mxu0 0.0
    %327 = vmatpush.msra.mxu0 0.0
    %328 = vmatpush.msra.mxu0 0.0
    %329 = vmatpush.msra.mxu0 %v150
    %330 = vmatpush.msra.mxu0 %v149
    %331 = vmatpush.msra.mxu0 %v148
    %332 = vmatpush.msra.mxu0 %v147
    %333 = vmatmul.f32.gmra.mxu0 %v315
    %v334 = vpop.f32.mrf.mxu0
    %v335 = vadd.f32 0.0, %v334
    %336 = vdwg.mxu0
    %v337 = vadd.f32 %v313, %v335
    %v338 = vxor.u32 %v337, 2147483648
    %v339 = vmul.f32 %v338, 1.442695
    %v340 = vpow.pop %v339
    %v341 = vadd.f32 %v340, 1.0
    %v342 = vrcp.pop %v341
    %v343 = vmul.f32 %v341, %v342
    %v344 = vsub.f32 1.0, %v343
    %v345 = vmul.f32 %v342, %v344
    %v346 = vadd.f32 %v342, %v345
    %vm347 = vweird.f32 %v341
    %vm348 = vweird.f32 %v342
    %vm349 = vmor %vm347, %vm348
    %v350 = vsel %vm349, %v342, %v346
    %v351 = vand.u32 2147483647, %v341
    %vm352 = vcmp.eq.f32.partialorder %v351, 8.507059e+37
    %v353 = vand.u32 %v341, 2147483648
    %v354 = vor.u32 1.1754944e-38, %v353
    %v355 = vsel %vm352, %v354, %v350
    %v356 = vmul.f32 1.0, %v355
    %v357 = vadd.f32 %v335, %v200
    %359 = vrot.lane.b32.xlu0 %v357, 64
    %v360 = vpop.permute.xlu0 %359
    %v362 = vmul.f32 %v356, %v360
    %364 = vrot.lane.b32.xlu0 %v362, 64
    %v365 = vpop.permute.xlu0 %364
    %v367 = vadd.f32 %v313, %v365
    %v368 = vtanh.pop %v367
    %370 = vrot.lane.b32.xlu0 %v368, 64
    %v371 = vpop.permute.xlu0 %370
    %v373 = vsub.f32 %v311, %v371
    %375 = vrot.lane.b32.xlu0 %v373, 32
    %v376 = vpop.permute.xlu0 %375
    %v378 = vmul.f32 %v356, %v376
    %380 = vrot.lane.b32.xlu0 %v378, 32
    %v381 = vpop.permute.xlu0 %380
    %v383 = vadd.f32 %v368, %v381
    %s384 = scalar_lea.vmem %s1, 16
    %v385 = vld [vmem:[%s384] sm:$0xff]
    %vm386 = vcmp.ne.f32.partialorder %v385, 0.0
    %388 = vrot.lane.b32.xlu0 %v383, 64
    %v389 = vpop.permute.xlu0 %388
    %v391 = vsel %vm386, %v389, %v311
    %s392 = scalar_lea.vmem [#allocation2], 24
    %v393 = vld [vmem:[%s392] sm:$0xff]
    %v395 = vsel %vm155, %v391, 0
    %397 = vmatpush.msra.mxu0 0.0
    %398 = vmatpush.msra.mxu0 0.0
    %399 = vmatpush.msra.mxu0 0.0
    %400 = vmatpush.msra.mxu0 0.0
    %401 = vmatpush.msra.mxu0 0.0
    %402 = vmatpush.msra.mxu0 0.0
    %403 = vmatpush.msra.mxu0 0.0
    %404 = vmatpush.msra.mxu0 0.0
    %405 = vmatpush.msra.mxu0 0.0
    %406 = vmatpush.msra.mxu0 0.0
    %407 = vmatpush.msra.mxu0 0.0
    %408 = vmatpush.msra.mxu0 0.0
    %409 = vmatpush.msra.mxu0 %v150
    %410 = vmatpush.msra.mxu0 %v149
    %411 = vmatpush.msra.mxu0 %v148
    %412 = vmatpush.msra.mxu0 %v147
    %413 = vmatmul.f32.gmra.mxu0 %v395
    %v414 = vpop.f32.mrf.mxu0
    %v415 = vadd.f32 0.0, %v414
    %416 = vdwg.mxu0
    %v417 = vadd.f32 %v393, %v415
    %v418 = vxor.u32 %v417, 2147483648
    %v419 = vmul.f32 %v418, 1.442695
    %v420 = vpow.pop %v419
    %v421 = vadd.f32 %v420, 1.0
    %v422 = vrcp.pop %v421
    %v423 = vmul.f32 %v421, %v422
    %v424 = vsub.f32 1.0, %v423
    %v425 = vmul.f32 %v422, %v424
    %v426 = vadd.f32 %v422, %v425
    %vm427 = vweird.f32 %v421
    %vm428 = vweird.f32 %v422
    %vm429 = vmor %vm427, %vm428
    %v430 = vsel %vm429, %v422, %v426
    %v431 = vand.u32 2147483647, %v421
    %vm432 = vcmp.eq.f32.partialorder %v431, 8.507059e+37
    %v433 = vand.u32 %v421, 2147483648
    %v434 = vor.u32 1.1754944e-38, %v433
    %v435 = vsel %vm432, %v434, %v430
    %v436 = vmul.f32 1.0, %v435
    %v437 = vadd.f32 %v415, %v200
    %439 = vrot.lane.b32.xlu0 %v437, 64
    %v440 = vpop.permute.xlu0 %439
    %v442 = vmul.f32 %v436, %v440
    %444 = vrot.lane.b32.xlu0 %v442, 64
    %v445 = vpop.permute.xlu0 %444
    %v447 = vadd.f32 %v393, %v445
    %v448 = vtanh.pop %v447
    %450 = vrot.lane.b32.xlu0 %v448, 64
    %v451 = vpop.permute.xlu0 %450
    %v453 = vsub.f32 %v391, %v451
    %455 = vrot.lane.b32.xlu0 %v453, 32
    %v456 = vpop.permute.xlu0 %455
    %v458 = vmul.f32 %v436, %v456
    %460 = vrot.lane.b32.xlu0 %v458, 32
    %v461 = vpop.permute.xlu0 %460
    %v463 = vadd.f32 %v448, %v461
    %s464 = scalar_lea.vmem %s1, 24
    %v465 = vld [vmem:[%s464] sm:$0xff]
    %vm466 = vcmp.ne.f32.partialorder %v465, 0.0
    %468 = vrot.lane.b32.xlu0 %v463, 64
    %v469 = vpop.permute.xlu0 %468
    %v471 = vsel %vm466, %v469, %v391
    %s472 = scalar_lea.vmem [#allocation2], 32
    %v473 = vld [vmem:[%s472] sm:$0xff]
    %v475 = vsel %vm155, %v471, 0
    %477 = vmatpush.msra.mxu0 0.0
    %478 = vmatpush.msra.mxu0 0.0
    %479 = vmatpush.msra.mxu0 0.0
    %480 = vmatpush.msra.mxu0 0.0
    %481 = vmatpush.msra.mxu0 0.0
    %482 = vmatpush.msra.mxu0 0.0
    %483 = vmatpush.msra.mxu0 0.0
    %484 = vmatpush.msra.mxu0 0.0
    %485 = vmatpush.msra.mxu0 0.0
    %486 = vmatpush.msra.mxu0 0.0
    %487 = vmatpush.msra.mxu0 0.0
    %488 = vmatpush.msra.mxu0 0.0
    %489 = vmatpush.msra.mxu0 %v150
    %490 = vmatpush.msra.mxu0 %v149
    %491 = vmatpush.msra.mxu0 %v148
    %492 = vmatpush.msra.mxu0 %v147
    %493 = vmatmul.f32.gmra.mxu0 %v475
    %v494 = vpop.f32.mrf.mxu0
    %v495 = vadd.f32 0.0, %v494
    %496 = vdwg.mxu0
    %v497 = vadd.f32 %v473, %v495
    %v498 = vxor.u32 %v497, 2147483648
    %v499 = vmul.f32 %v498, 1.442695
    %v500 = vpow.pop %v499
    %v501 = vadd.f32 %v500, 1.0
    %v502 = vrcp.pop %v501
    %v503 = vmul.f32 %v501, %v502
    %v504 = vsub.f32 1.0, %v503
    %v505 = vmul.f32 %v502, %v504
    %v506 = vadd.f32 %v502, %v505
    %vm507 = vweird.f32 %v501
    %vm508 = vweird.f32 %v502
    %vm509 = vmor %vm507, %vm508
    %v510 = vsel %vm509, %v502, %v506
    %v511 = vand.u32 2147483647, %v501
    %vm512 = vcmp.eq.f32.partialorder %v511, 8.507059e+37
    %v513 = vand.u32 %v501, 2147483648
    %v514 = vor.u32 1.1754944e-38, %v513
    %v515 = vsel %vm512, %v514, %v510
    %v516 = vmul.f32 1.0, %v515
    %v517 = vadd.f32 %v495, %v200
    %519 = vrot.lane.b32.xlu0 %v517, 64
    %v520 = vpop.permute.xlu0 %519
    %v522 = vmul.f32 %v516, %v520
    %524 = vrot.lane.b32.xlu0 %v522, 64
    %v525 = vpop.permute.xlu0 %524
    %v527 = vadd.f32 %v473, %v525
    %v528 = vtanh.pop %v527
    %530 = vrot.lane.b32.xlu0 %v528, 64
    %v531 = vpop.permute.xlu0 %530
    %v533 = vsub.f32 %v471, %v531
    %535 = vrot.lane.b32.xlu0 %v533, 32
    %v536 = vpop.permute.xlu0 %535
    %v538 = vmul.f32 %v516, %v536
    %540 = vrot.lane.b32.xlu0 %v538, 32
    %v541 = vpop.permute.xlu0 %540
    %v543 = vadd.f32 %v528, %v541
    %s544 = scalar_lea.vmem %s1, 32
    %v545 = vld [vmem:[%s544] sm:$0xff]
    %vm546 = vcmp.ne.f32.partialorder %v545, 0.0
    %548 = vrot.lane.b32.xlu0 %v543, 64
    %v549 = vpop.permute.xlu0 %548
    %v551 = vsel %vm546, %v549, %v471
    %s552 = scalar_lea.vmem [#allocation2], 40
    %v553 = vld [vmem:[%s552] sm:$0xff]
    %v555 = vsel %vm155, %v551, 0
    %557 = vmatpush.msra.mxu0 0.0
    %558 = vmatpush.msra.mxu0 0.0
    %559 = vmatpush.msra.mxu0 0.0
    %560 = vmatpush.msra.mxu0 0.0
    %561 = vmatpush.msra.mxu0 0.0
    %562 = vmatpush.msra.mxu0 0.0
    %563 = vmatpush.msra.mxu0 0.0
    %564 = vmatpush.msra.mxu0 0.0
    %565 = vmatpush.msra.mxu0 0.0
    %566 = vmatpush.msra.mxu0 0.0
    %567 = vmatpush.msra.mxu0 0.0
    %568 = vmatpush.msra.mxu0 0.0
    %569 = vmatpush.msra.mxu0 %v150
    %570 = vmatpush.msra.mxu0 %v149
    %571 = vmatpush.msra.mxu0 %v148
    %572 = vmatpush.msra.mxu0 %v147
    %573 = vmatmul.f32.gmra.mxu0 %v555
    %v574 = vpop.f32.mrf.mxu0
    %v575 = vadd.f32 0.0, %v574
    %576 = vdwg.mxu0
    %v577 = vadd.f32 %v553, %v575
    %v578 = vxor.u32 %v577, 2147483648
    %v579 = vmul.f32 %v578, 1.442695
    %v580 = vpow.pop %v579
    %v581 = vadd.f32 %v580, 1.0
    %v582 = vrcp.pop %v581
    %v583 = vmul.f32 %v581, %v582
    %v584 = vsub.f32 1.0, %v583
    %v585 = vmul.f32 %v582, %v584
    %v586 = vadd.f32 %v582, %v585
    %vm587 = vweird.f32 %v581
    %vm588 = vweird.f32 %v582
    %vm589 = vmor %vm587, %vm588
    %v590 = vsel %vm589, %v582, %v586
    %v591 = vand.u32 2147483647, %v581
    %vm592 = vcmp.eq.f32.partialorder %v591, 8.507059e+37
    %v593 = vand.u32 %v581, 2147483648
    %v594 = vor.u32 1.1754944e-38, %v593
    %v595 = vsel %vm592, %v594, %v590
    %v596 = vmul.f32 1.0, %v595
    %v597 = vadd.f32 %v575, %v200
    %599 = vrot.lane.b32.xlu0 %v597, 64
    %v600 = vpop.permute.xlu0 %599
    %v602 = vmul.f32 %v596, %v600
    %604 = vrot.lane.b32.xlu0 %v602, 64
    %v605 = vpop.permute.xlu0 %604
    %v607 = vadd.f32 %v553, %v605
    %v608 = vtanh.pop %v607
    %610 = vrot.lane.b32.xlu0 %v608, 64
    %v611 = vpop.permute.xlu0 %610
    %v613 = vsub.f32 %v551, %v611
    %615 = vrot.lane.b32.xlu0 %v613, 32
    %v616 = vpop.permute.xlu0 %615
    %v618 = vmul.f32 %v596, %v616
    %620 = vrot.lane.b32.xlu0 %v618, 32
    %v621 = vpop.permute.xlu0 %620
    %v623 = vadd.f32 %v608, %v621
    %s624 = scalar_lea.vmem %s1, 40
    %v625 = vld [vmem:[%s624] sm:$0xff]
    %vm626 = vcmp.ne.f32.partialorder %v625, 0.0
    %628 = vrot.lane.b32.xlu0 %v623, 64
    %v629 = vpop.permute.xlu0 %628
    %v631 = vsel %vm626, %v629, %v551
    %s632 = scalar_lea.vmem [#allocation2], 48
    %v633 = vld [vmem:[%s632] sm:$0xff]
    %v635 = vsel %vm155, %v631, 0
    %637 = vmatpush.msra.mxu0 0.0
    %638 = vmatpush.msra.mxu0 0.0
    %639 = vmatpush.msra.mxu0 0.0
    %640 = vmatpush.msra.mxu0 0.0
    %641 = vmatpush.msra.mxu0 0.0
    %642 = vmatpush.msra.mxu0 0.0
    %643 = vmatpush.msra.mxu0 0.0
    %644 = vmatpush.msra.mxu0 0.0
    %645 = vmatpush.msra.mxu0 0.0
    %646 = vmatpush.msra.mxu0 0.0
    %647 = vmatpush.msra.mxu0 0.0
    %648 = vmatpush.msra.mxu0 0.0
    %649 = vmatpush.msra.mxu0 %v150
    %650 = vmatpush.msra.mxu0 %v149
    %651 = vmatpush.msra.mxu0 %v148
    %652 = vmatpush.msra.mxu0 %v147
    %653 = vmatmul.f32.gmra.mxu0 %v635
    %v654 = vpop.f32.mrf.mxu0
    %v655 = vadd.f32 0.0, %v654
    %656 = vdwg.mxu0
    %v657 = vadd.f32 %v633, %v655
    %v658 = vxor.u32 %v657, 2147483648
    %v659 = vmul.f32 %v658, 1.442695
    %v660 = vpow.pop %v659
    %v661 = vadd.f32 %v660, 1.0
    %v662 = vrcp.pop %v661
    %v663 = vmul.f32 %v661, %v662
    %v664 = vsub.f32 1.0, %v663
    %v665 = vmul.f32 %v662, %v664
    %v666 = vadd.f32 %v662, %v665
    %vm667 = vweird.f32 %v661
    %vm668 = vweird.f32 %v662
    %vm669 = vmor %vm667, %vm668
    %v670 = vsel %vm669, %v662, %v666
    %v671 = vand.u32 2147483647, %v661
    %vm672 = vcmp.eq.f32.partialorder %v671, 8.507059e+37
    %v673 = vand.u32 %v661, 2147483648
    %v674 = vor.u32 1.1754944e-38, %v673
    %v675 = vsel %vm672, %v674, %v670
    %v676 = vmul.f32 1.0, %v675
    %v677 = vadd.f32 %v655, %v200
    %679 = vrot.lane.b32.xlu0 %v677, 64
    %v680 = vpop.permute.xlu0 %679
    %v682 = vmul.f32 %v676, %v680
    %684 = vrot.lane.b32.xlu0 %v682, 64
    %v685 = vpop.permute.xlu0 %684
    %v687 = vadd.f32 %v633, %v685
    %v688 = vtanh.pop %v687
    %690 = vrot.lane.b32.xlu0 %v688, 64
    %v691 = vpop.permute.xlu0 %690
    %v693 = vsub.f32 %v631, %v691
    %695 = vrot.lane.b32.xlu0 %v693, 32
    %v696 = vpop.permute.xlu0 %695
    %v698 = vmul.f32 %v676, %v696
    %700 = vrot.lane.b32.xlu0 %v698, 32
    %v701 = vpop.permute.xlu0 %700
    %v703 = vadd.f32 %v688, %v701
    %s704 = scalar_lea.vmem %s1, 48
    %v705 = vld [vmem:[%s704] sm:$0xff]
    %vm706 = vcmp.ne.f32.partialorder %v705, 0.0
    %708 = vrot.lane.b32.xlu0 %v703, 64
    %v709 = vpop.permute.xlu0 %708
    %v711 = vsel %vm706, %v709, %v631
    %s712 = scalar_lea.vmem [#allocation2], 56
    %v713 = vld [vmem:[%s712] sm:$0xff]
    %v715 = vsel %vm155, %v711, 0
    %717 = vmatpush.msra.mxu0 0.0
    %718 = vmatpush.msra.mxu0 0.0
    %719 = vmatpush.msra.mxu0 0.0
    %720 = vmatpush.msra.mxu0 0.0
    %721 = vmatpush.msra.mxu0 0.0
    %722 = vmatpush.msra.mxu0 0.0
    %723 = vmatpush.msra.mxu0 0.0
    %724 = vmatpush.msra.mxu0 0.0
    %725 = vmatpush.msra.mxu0 0.0
    %726 = vmatpush.msra.mxu0 0.0
    %727 = vmatpush.msra.mxu0 0.0
    %728 = vmatpush.msra.mxu0 0.0
    %729 = vmatpush.msra.mxu0 %v150
    %730 = vmatpush.msra.mxu0 %v149
    %731 = vmatpush.msra.mxu0 %v148
    %732 = vmatpush.msra.mxu0 %v147
    %733 = vmatmul.f32.gmra.mxu0 %v715
    %v734 = vpop.f32.mrf.mxu0
    %v735 = vadd.f32 0.0, %v734
    %736 = vdwg.mxu0
    %v737 = vadd.f32 %v713, %v735
    %v738 = vxor.u32 %v737, 2147483648
    %v739 = vmul.f32 %v738, 1.442695
    %v740 = vpow.pop %v739
    %v741 = vadd.f32 %v740, 1.0
    %v742 = vrcp.pop %v741
    %v743 = vmul.f32 %v741, %v742
    %v744 = vsub.f32 1.0, %v743
    %v745 = vmul.f32 %v742, %v744
    %v746 = vadd.f32 %v742, %v745
    %vm747 = vweird.f32 %v741
    %vm748 = vweird.f32 %v742
    %vm749 = vmor %vm747, %vm748
    %v750 = vsel %vm749, %v742, %v746
    %v751 = vand.u32 2147483647, %v741
    %vm752 = vcmp.eq.f32.partialorder %v751, 8.507059e+37
    %v753 = vand.u32 %v741, 2147483648
    %v754 = vor.u32 1.1754944e-38, %v753
    %v755 = vsel %vm752, %v754, %v750
    %v756 = vmul.f32 1.0, %v755
    %v757 = vadd.f32 %v735, %v200
    %759 = vrot.lane.b32.xlu0 %v757, 64
    %v760 = vpop.permute.xlu0 %759
    %v762 = vmul.f32 %v756, %v760
    %764 = vrot.lane.b32.xlu0 %v762, 64
    %v765 = vpop.permute.xlu0 %764
    %v767 = vadd.f32 %v713, %v765
    %v768 = vtanh.pop %v767
    %770 = vrot.lane.b32.xlu0 %v768, 64
    %v771 = vpop.permute.xlu0 %770
    %v773 = vsub.f32 %v711, %v771
    %775 = vrot.lane.b32.xlu0 %v773, 32
    %v776 = vpop.permute.xlu0 %775
    %v778 = vmul.f32 %v756, %v776
    %780 = vrot.lane.b32.xlu0 %v778, 32
    %v781 = vpop.permute.xlu0 %780
    %v783 = vadd.f32 %v768, %v781
    %s784 = scalar_lea.vmem %s1, 56
    %v785 = vld [vmem:[%s784] sm:$0xff]
    %vm786 = vcmp.ne.f32.partialorder %v785, 0.0
    %788 = vrot.lane.b32.xlu0 %v783, 64
    %v789 = vpop.permute.xlu0 %788
    %v791 = vsel %vm786, %v789, %v711
    %s792 = scalar_lea.vmem [#allocation2], 64
    %v793 = vld [vmem:[%s792] sm:$0xff]
    %v795 = vsel %vm155, %v791, 0
    %797 = vmatpush.msra.mxu0 0.0
    %798 = vmatpush.msra.mxu0 0.0
    %799 = vmatpush.msra.mxu0 0.0
    %800 = vmatpush.msra.mxu0 0.0
    %801 = vmatpush.msra.mxu0 0.0
    %802 = vmatpush.msra.mxu0 0.0
    %803 = vmatpush.msra.mxu0 0.0
    %804 = vmatpush.msra.mxu0 0.0
    %805 = vmatpush.msra.mxu0 0.0
    %806 = vmatpush.msra.mxu0 0.0
    %807 = vmatpush.msra.mxu0 0.0
    %808 = vmatpush.msra.mxu0 0.0
    %809 = vmatpush.msra.mxu0 %v150
    %810 = vmatpush.msra.mxu0 %v149
    %811 = vmatpush.msra.mxu0 %v148
    %812 = vmatpush.msra.mxu0 %v147
    %813 = vmatmul.f32.gmra.mxu0 %v795
    %v814 = vpop.f32.mrf.mxu0
    %v815 = vadd.f32 0.0, %v814
    %816 = vdwg.mxu0
    %v817 = vadd.f32 %v793, %v815
    %v818 = vxor.u32 %v817, 2147483648
    %v819 = vmul.f32 %v818, 1.442695
    %v820 = vpow.pop %v819
    %v821 = vadd.f32 %v820, 1.0
    %v822 = vrcp.pop %v821
    %v823 = vmul.f32 %v821, %v822
    %v824 = vsub.f32 1.0, %v823
    %v825 = vmul.f32 %v822, %v824
    %v826 = vadd.f32 %v822, %v825
    %vm827 = vweird.f32 %v821
    %vm828 = vweird.f32 %v822
    %vm829 = vmor %vm827, %vm828
    %v830 = vsel %vm829, %v822, %v826
    %v831 = vand.u32 2147483647, %v821
    %vm832 = vcmp.eq.f32.partialorder %v831, 8.507059e+37
    %v833 = vand.u32 %v821, 2147483648
    %v834 = vor.u32 1.1754944e-38, %v833
    %v835 = vsel %vm832, %v834, %v830
    %v836 = vmul.f32 1.0, %v835
    %v837 = vadd.f32 %v815, %v200
    %839 = vrot.lane.b32.xlu0 %v837, 64
    %v840 = vpop.permute.xlu0 %839
    %v842 = vmul.f32 %v836, %v840
    %844 = vrot.lane.b32.xlu0 %v842, 64
    %v845 = vpop.permute.xlu0 %844
    %v847 = vadd.f32 %v793, %v845
    %v848 = vtanh.pop %v847
    %850 = vrot.lane.b32.xlu0 %v848, 64
    %v851 = vpop.permute.xlu0 %850
    %v853 = vsub.f32 %v791, %v851
    %855 = vrot.lane.b32.xlu0 %v853, 32
    %v856 = vpop.permute.xlu0 %855
    %v858 = vmul.f32 %v836, %v856
    %860 = vrot.lane.b32.xlu0 %v858, 32
    %v861 = vpop.permute.xlu0 %860
    %v863 = vadd.f32 %v848, %v861
    %s864 = scalar_lea.vmem %s1, 64
    %v865 = vld [vmem:[%s864] sm:$0xff]
    %vm866 = vcmp.ne.f32.partialorder %v865, 0.0
    %868 = vrot.lane.b32.xlu0 %v863, 64
    %v869 = vpop.permute.xlu0 %868
    %v871 = vsel %vm866, %v869, %v791
    %s872 = scalar_lea.vmem [#allocation2], 72
    %v873 = vld [vmem:[%s872] sm:$0xff]
    %v875 = vsel %vm155, %v871, 0
    %877 = vmatpush.msra.mxu0 0.0
    %878 = vmatpush.msra.mxu0 0.0
    %879 = vmatpush.msra.mxu0 0.0
    %880 = vmatpush.msra.mxu0 0.0
    %881 = vmatpush.msra.mxu0 0.0
    %882 = vmatpush.msra.mxu0 0.0
    %883 = vmatpush.msra.mxu0 0.0
    %884 = vmatpush.msra.mxu0 0.0
    %885 = vmatpush.msra.mxu0 0.0
    %886 = vmatpush.msra.mxu0 0.0
    %887 = vmatpush.msra.mxu0 0.0
    %888 = vmatpush.msra.mxu0 0.0
    %889 = vmatpush.msra.mxu0 %v150
    %890 = vmatpush.msra.mxu0 %v149
    %891 = vmatpush.msra.mxu0 %v148
    %892 = vmatpush.msra.mxu0 %v147
    %893 = vmatmul.f32.gmra.mxu0 %v875
    %v894 = vpop.f32.mrf.mxu0
    %v895 = vadd.f32 0.0, %v894
    %896 = vdwg.mxu0
    %v897 = vadd.f32 %v873, %v895
    %v898 = vxor.u32 %v897, 2147483648
    %v899 = vmul.f32 %v898, 1.442695
    %v900 = vpow.pop %v899
    %v901 = vadd.f32 %v900, 1.0
    %v902 = vrcp.pop %v901
    %v903 = vmul.f32 %v901, %v902
    %v904 = vsub.f32 1.0, %v903
    %v905 = vmul.f32 %v902, %v904
    %v906 = vadd.f32 %v902, %v905
    %vm907 = vweird.f32 %v901
    %vm908 = vweird.f32 %v902
    %vm909 = vmor %vm907, %vm908
    %v910 = vsel %vm909, %v902, %v906
    %v911 = vand.u32 2147483647, %v901
    %vm912 = vcmp.eq.f32.partialorder %v911, 8.507059e+37
    %v913 = vand.u32 %v901, 2147483648
    %v914 = vor.u32 1.1754944e-38, %v913
    %v915 = vsel %vm912, %v914, %v910
    %v916 = vmul.f32 1.0, %v915
    %v917 = vadd.f32 %v895, %v200
    %919 = vrot.lane.b32.xlu0 %v917, 64
    %v920 = vpop.permute.xlu0 %919
    %v922 = vmul.f32 %v916, %v920
    %924 = vrot.lane.b32.xlu0 %v922, 64
    %v925 = vpop.permute.xlu0 %924
    %v927 = vadd.f32 %v873, %v925
    %v928 = vtanh.pop %v927
    %930 = vrot.lane.b32.xlu0 %v928, 64
    %v931 = vpop.permute.xlu0 %930
    %v933 = vsub.f32 %v871, %v931
    %935 = vrot.lane.b32.xlu0 %v933, 32
    %v936 = vpop.permute.xlu0 %935
    %v938 = vmul.f32 %v916, %v936
    %940 = vrot.lane.b32.xlu0 %v938, 32
    %v941 = vpop.permute.xlu0 %940
    %v943 = vadd.f32 %v928, %v941
    %s944 = scalar_lea.vmem %s1, 72
    %v945 = vld [vmem:[%s944] sm:$0xff]
    %vm946 = vcmp.ne.f32.partialorder %v945, 0.0
    %948 = vrot.lane.b32.xlu0 %v943, 64
    %v949 = vpop.permute.xlu0 %948
    %v951 = vsel %vm946, %v949, %v871
    %v952 = vld [vmem:[%s6] sm:$0xff]
    %v953 = vld [vmem:[%s6 + $0x8] sm:$0xff]
    %v954 = vld [vmem:[%s6 + $0x10] sm:$0xff]
    %v955 = vld [vmem:[%s6 + $0x18] sm:$0xff]
    %v956 = vld [vmem:[%s7] sm:$0x1]
    %v958 = vperm.slane %v956, 0
    %v961 = vsel %vm155, %v951, 0
    %963 = vmatpush.msra.mxu0 0.0
    %964 = vmatpush.msra.mxu0 0.0
    %965 = vmatpush.msra.mxu0 0.0
    %966 = vmatpush.msra.mxu0 0.0
    %967 = vmatpush.msra.mxu0 0.0
    %968 = vmatpush.msra.mxu0 0.0
    %969 = vmatpush.msra.mxu0 0.0
    %970 = vmatpush.msra.mxu0 0.0
    %971 = vmatpush.msra.mxu0 0.0
    %972 = vmatpush.msra.mxu0 0.0
    %973 = vmatpush.msra.mxu0 0.0
    %974 = vmatpush.msra.mxu0 0.0
    %975 = vmatpush.msra.mxu0 %v955
    %976 = vmatpush.msra.mxu0 %v954
    %977 = vmatpush.msra.mxu0 %v953
    %978 = vmatpush.msra.mxu0 %v952
    %979 = vmatmul.f32.gmra.mxu0 %v961
    %v980 = vpop.f32.mrf.mxu0
    %v981 = vadd.f32 %v958, %v980
    %982 = vdwg.mxu0
    %v983 = vxor.u32 %v981, 2147483648
    %v984 = vmul.f32 %v983, 1.442695
    %v985 = vpow.pop %v984
    %v986 = vadd.f32 %v985, 1.0
    %v987 = vrcp.pop %v986
    %v988 = vmul.f32 %v986, %v987
    %v989 = vsub.f32 1.0, %v988
    %v990 = vmul.f32 %v987, %v989
    %v991 = vadd.f32 %v987, %v990
    %vm992 = vweird.f32 %v986
    %vm993 = vweird.f32 %v987
    %vm994 = vmor %vm992, %vm993
    %v995 = vsel %vm994, %v987, %v991
    %v996 = vand.u32 2147483647, %v986
    %vm997 = vcmp.eq.f32.partialorder %v996, 8.507059e+37
    %v998 = vand.u32 %v986, 2147483648
    %v999 = vor.u32 1.1754944e-38, %v998
    %v1000 = vsel %vm997, %v999, %v995
    %v1001 = vmul.f32 1.0, %v1000
    %vm1002 = vcmask 23552
    %1003 = vst.msk [vmem:[%s8] sm:$0xff] %vm1002, %v1001
    // Predicated region
    $region38: #{tpu_custom_call.1} parent=1 // pred_check
      _
    $region39: #{tpu_custom_call.1} parent=1 // pred_check_branch
      %1005 = sbr.rel (0) target = $region41
    $region40: #{tpu_custom_call.1} parent=1 // pred_region
      _
    $region41: #{tpu_custom_call.1} parent=1 // pred_fallthru
      _
    // Predicated region
    $region42: #{tpu_custom_call.1} parent=1 // pred_check
      _
    $region43: #{tpu_custom_call.1} parent=1 // pred_check_branch
      %1007 = sbr.rel (0) target = $region45
    $region44: #{tpu_custom_call.1} parent=1 // pred_region
      _
    $region45: #{tpu_custom_call.1} parent=1 // pred_fallthru
      _
    %1008 = vsyncpa [#allocation4], 1

</llo_original>
